<compile_context>
chip_gen: v7x
topology: tpu7x:2x2x1
jax: 0.10.0
libtpu: 0.0.40
codegen_flags: <defaults>
</compile_context>

<pallas_src>
import jax
import jax.numpy as jnp
from jax.experimental import pallas as pl
from jax.experimental.pallas import tpu as pltpu

# ---- synthetic BERT config (real module: hidden=768, 12 layers, 12 heads, seq<=250) ----
VOCAB, TYPE_VOCAB, MAX_POS = 64, 2, 16
HIDDEN, NUM_HEADS, HEAD_DIM = 128, 4, 32      # HIDDEN = 128 -> lane-dense activations/stores
INTERMEDIATE = 4 * HIDDEN
NUM_LAYERS = 2
BATCH, SEQ = 2, 8
LN_EPS = 1e-12                                # HF BertConfig default

# Column offsets inside the fused bf16 weight slab wa = [Wqkv | Wo | W1]  (K = HIDDEN)
QKV_COLS = 3 * HIDDEN                         # 384
WO_COL0, WO_COL1 = QKV_COLS, QKV_COLS + HIDDEN          # 384 .. 512
W1_COL0, W1_COL1 = WO_COL1, WO_COL1 + INTERMEDIATE      # 512 .. 1024
WA_COLS = W1_COL1

# Row layout of the f32 bias / layernorm slab (each row padded to VEC_WIDTH lanes)
R_BQKV, R_BO, R_B1, R_B2, R_G1, R_BE1, R_G2, R_BE2 = range(8)
VEC_ROWS = 8
VEC_WIDTH = max(QKV_COLS, INTERMEDIATE)       # 512


def _layernorm(x, gamma, beta):
    # f32 statistics; rsqrt goes to the EUP.
    mu = jnp.mean(x, axis=-1, keepdims=True)
    var = jnp.mean((x - mu) ** 2, axis=-1, keepdims=True)
    return (x - mu) * jax.lax.rsqrt(var + LN_EPS) * gamma + beta


def bert_layer_kernel(x_ref, mb_ref, wa_ref, w2_ref, vec_ref, o_ref):
    """One grid step == one transformer layer for one batch element.

    o_ref's block index is constant across the layer axis, so it stays resident in VMEM and
    doubles as the layer-to-layer activation carry; HBM writeback happens once per batch."""
    layer = pl.program_id(1)

    @pl.when(layer == 0)
    def _():
        o_ref[...] = x_ref[...]          # load embeddings into the resident activation block

    x = o_ref[0]                         # (S, H) f32, carried across layers in VMEM
    mbias = mb_ref[0]                    # (1, S) additive attention-mask bias
    wa = wa_ref[0]                       # (H, 3H+H+I) bf16 fused weight slab
    w2 = w2_ref[0]                       # (I, H) bf16
    vec = vec_ref[0]                     # (8, VEC_WIDTH) f32 bias / layernorm slab

    b_qkv = vec[R_BQKV:R_BQKV + 1, :QKV_COLS]        # (1, 3H)  (scale pre-folded into bq)
    b_o = vec[R_BO:R_BO + 1, :HIDDEN]                # (1, H)
    b_1 = vec[R_B1:R_B1 + 1, :INTERMEDIATE]          # (1, I)
    b_2 = vec[R_B2:R_B2 + 1, :HIDDEN]                # (1, H)
    g1 = vec[R_G1:R_G1 + 1, :HIDDEN]
    be1 = vec[R_BE1:R_BE1 + 1, :HIDDEN]
    g2 = vec[R_G2:R_G2 + 1, :HIDDEN]
    be2 = vec[R_BE2:R_BE2 + 1, :HIDDEN]

    bf16 = jnp.bfloat16
    x_bf = x.astype(bf16)                # activation slab cast exactly once for QKV

    # ---- attention: fused QKV projection, head-batched score/context dots ----
    qkv = jnp.dot(x_bf, wa[:, :QKV_COLS], preferred_element_type=jnp.float32) + b_qkv

    def to_heads(t):                     # (S, H) f32 -> (NH, S, HD) bf16
        return jnp.swapaxes(t.reshape(SEQ, NUM_HEADS, HEAD_DIM), 0, 1).astype(bf16)

    q = to_heads(qkv[:, :HIDDEN])        # 1/sqrt(HEAD_DIM) already folded into Wq/bq on host
    k = to_heads(qkv[:, HIDDEN:2 * HIDDEN])
    v = to_heads(qkv[:, 2 * HIDDEN:])

    s = jnp.einsum('nsd,ntd->nst', q, k, preferred_element_type=jnp.float32)   # (NH, S, S)
    s = s + mbias                        # (1, S) broadcasts over key positions
    s = s - jnp.max(s, axis=-1, keepdims=True)
    p = jnp.exp(s)                       # f32 softmax statistics
    p = p * pl.reciprocal(jnp.sum(p, axis=-1, keepdims=True), approx=True)

    ctx = jnp.einsum('nst,ntd->nsd', p.astype(bf16), v,
                     preferred_element_type=jnp.float32)                        # (NH, S, HD)
    ctx_flat = jnp.swapaxes(ctx, 0, 1).reshape(SEQ, HIDDEN)  # heads back onto the lane axis
    attn = jnp.dot(ctx_flat.astype(bf16), wa[:, WO_COL0:WO_COL1],
                   preferred_element_type=jnp.float32) + b_o                    # (S, H)

    h1 = _layernorm(x + attn, g1, be1)   # add & norm (f32)

    # ---- feed-forward ----
    inter = jnp.dot(h1.astype(bf16), wa[:, W1_COL0:W1_COL1],
                    preferred_element_type=jnp.float32) + b_1                   # (S, I)
    # TODO(synk): HF BERT default is exact erf-GELU; tanh-approximate GELU used here.
    inter = jax.nn.gelu(inter, approximate=True)
    ffn = jnp.dot(inter.astype(bf16), w2, preferred_element_type=jnp.float32) + b_2
    out = _layernorm(h1 + ffn, g2, be2)

    o_ref[0] = out                       # carry to next layer; flushed to HBM once per batch


def bert_stack(x_emb, mask_bias, packed):
    """x_emb: (B, S, H) f32 embeddings; mask_bias: (B, 1, S) f32; packed: dict of stacked params."""
    B, S, H = x_emb.shape
    wa, w2, vec = packed["wa"], packed["w2"], packed["vec"]
    return pl.pallas_call(
        bert_layer_kernel,
        out_shape=jax.ShapeDtypeStruct((B, S, H), jnp.float32),
        grid=(B, NUM_LAYERS),
        in_specs=[
            pl.BlockSpec((1, S, H), lambda b, l: (b, 0, 0)),          # embeddings: once per batch
            pl.BlockSpec((1, 1, S), lambda b, l: (b, 0, 0)),          # mask bias:  once per batch
            pl.BlockSpec((1,) + wa.shape[1:], lambda b, l: (l, 0, 0)),  # fused weight slab
            pl.BlockSpec((1,) + w2.shape[1:], lambda b, l: (l, 0, 0)),  # FFN down-proj
            pl.BlockSpec((1,) + vec.shape[1:], lambda b, l: (l, 0, 0)),  # biases + LN params
        ],
        out_specs=pl.BlockSpec((1, S, H), lambda b, l: (b, 0, 0)),    # resident activation carry
        compiler_params=pltpu.CompilerParams(
            dimension_semantics=("parallel", "arbitrary"),
            vmem_limit_bytes=32 * 1024 * 1024,
        ),
    )(x_emb, mask_bias, wa, w2, vec)


def init_params(key):
    """Logical (HF-style) parameter shapes."""
    def nrm(k, shape):
        return 0.02 * jax.random.normal(k, shape, jnp.float32)

    keys = jax.random.split(key, 3 + NUM_LAYERS)
    params = {
        "word_emb": nrm(keys[0], (VOCAB, HIDDEN)),
        "pos_emb": nrm(keys[1], (MAX_POS, HIDDEN)),
        "type_emb": nrm(keys[2], (TYPE_VOCAB, HIDDEN)),
        "emb_ln_g": jnp.ones((HIDDEN,), jnp.float32),
        "emb_ln_b": jnp.zeros((HIDDEN,), jnp.float32),
        "layers": [],
    }
    for l in range(NUM_LAYERS):
        lk = jax.random.split(keys[3 + l], 12)
        params["layers"].append({
            "wq": nrm(lk[0], (HIDDEN, HIDDEN)), "bq": nrm(lk[1], (HIDDEN,)),
            "wk": nrm(lk[2], (HIDDEN, HIDDEN)), "bk": nrm(lk[3], (HIDDEN,)),
            "wv": nrm(lk[4], (HIDDEN, HIDDEN)), "bv": nrm(lk[5], (HIDDEN,)),
            "wo": nrm(lk[6], (HIDDEN, HIDDEN)), "bo": nrm(lk[7], (HIDDEN,)),
            "ln1_g": jnp.ones((HIDDEN,), jnp.float32), "ln1_b": jnp.zeros((HIDDEN,), jnp.float32),
            "w1": nrm(lk[8], (HIDDEN, INTERMEDIATE)), "b1": nrm(lk[9], (INTERMEDIATE,)),
            "w2": nrm(lk[10], (INTERMEDIATE, HIDDEN)), "b2": nrm(lk[11], (HIDDEN,)),
            "ln2_g": jnp.ones((HIDDEN,), jnp.float32), "ln2_b": jnp.zeros((HIDDEN,), jnp.float32),
        })
    return params


def pack_layer_params(layers):
    """Host-side (one-time) repack: fused bf16 weight slab [Wqkv|Wo|W1], separate W2, and a
    single padded f32 slab holding all biases / layernorm params; 1/sqrt(HEAD_DIM) folded into
    Wq/bq; everything stacked over layers for the layer grid axis."""
    scale = 1.0 / (HEAD_DIM ** 0.5)
    bf16 = jnp.bfloat16

    def pad_row(v):
        return jnp.zeros((VEC_WIDTH,), jnp.float32).at[: v.shape[0]].set(v.astype(jnp.float32))

    wa_l, w2_l, vec_l = [], [], []
    for lp in layers:
        wa = jnp.concatenate(
            [lp["wq"] * scale, lp["wk"], lp["wv"], lp["wo"], lp["w1"]], axis=1).astype(bf16)
        assert wa.shape == (HIDDEN, WA_COLS)
        wa_l.append(wa)
        w2_l.append(lp["w2"].astype(bf16))
        b_qkv = jnp.concatenate([lp["bq"] * scale, lp["bk"], lp["bv"]], axis=0)
        vec = jnp.stack([
            pad_row(b_qkv), pad_row(lp["bo"]), pad_row(lp["b1"]), pad_row(lp["b2"]),
            pad_row(lp["ln1_g"]), pad_row(lp["ln1_b"]), pad_row(lp["ln2_g"]), pad_row(lp["ln2_b"]),
        ], axis=0)
        assert vec.shape == (VEC_ROWS, VEC_WIDTH)
        vec_l.append(vec)
    return {"wa": jnp.stack(wa_l), "w2": jnp.stack(w2_l), "vec": jnp.stack(vec_l)}


def embed(input_ids, token_type_ids, params):
    # Glue: embedding gathers + embedding layernorm stay in plain JAX.
    B, S = input_ids.shape
    e = (params["word_emb"][input_ids]
         + params["pos_emb"][jnp.arange(S)][None, :, :]
         + params["type_emb"][token_type_ids])
    mu = e.mean(-1, keepdims=True)
    var = ((e - mu) ** 2).mean(-1, keepdims=True)
    return (e - mu) / jnp.sqrt(var + LN_EPS) * params["emb_ln_g"] + params["emb_ln_b"]


def bert_encoder_forward(input_ids, token_type_ids, attention_mask, params, packed):
    # Equivalent of: self.bert(ids, attention_mask, token_type_ids).last_hidden_state[:, 0, :]
    # (dropout is identity at inference).
    mask_bias = (1.0 - attention_mask.astype(jnp.float32))[:, None, :] * -1e4   # (B, 1, S)
    h = embed(input_ids, token_type_ids, params)                                # (B, S, H) f32
    out = bert_stack(h, mask_bias, packed)                                      # (B, S, H) f32
    return out[:, 0, :]                                                         # [CLS], (B, H)


if __name__ == "__main__":
    key = jax.random.PRNGKey(0)
    pkey, ikey = jax.random.split(key)
    params = init_params(pkey)
    packed = pack_layer_params(params["layers"])

    input_ids = jax.random.randint(ikey, (BATCH, SEQ), 0, VOCAB, dtype=jnp.int32)
    token_type_ids = jnp.concatenate(
        [jnp.zeros((BATCH, SEQ // 2), jnp.int32), jnp.ones((BATCH, SEQ // 2), jnp.int32)],
        axis=1)
    attention_mask = jnp.array([[1] * SEQ,
                                [1] * (SEQ - 2) + [0, 0]], dtype=jnp.float32)

    cls = bert_encoder_forward(input_ids, token_type_ids, attention_mask, params, packed)
    cls = jax.block_until_ready(cls)
    assert cls.shape == (BATCH, HIDDEN)
    assert bool(jnp.all(jnp.isfinite(cls)))
    print("KERNEL_OK")
</pallas_src>

<mosaic_0001>
module attributes {stable_mosaic.version = 11 : i64} {
  func.func @bert_layer_kernel(%arg0: i32, %arg1: i32, %arg2: memref<1x8x128xf32, #tpu.memory_space<vmem>>, %arg3: memref<1x1x8xf32, #tpu.memory_space<vmem>>, %arg4: memref<1x128x1024xbf16, #tpu.memory_space<vmem>>, %arg5: memref<1x512x128xbf16, #tpu.memory_space<vmem>>, %arg6: memref<1x8x512xf32, #tpu.memory_space<vmem>>, %arg7: memref<1x8x128xf32, #tpu.memory_space<vmem>>) attributes {dimension_semantics = [#tpu.dimension_semantics<parallel>, #tpu.dimension_semantics<arbitrary>], iteration_bounds = array<i64: 2, 2>, scalar_prefetch = 0 : i64, scratch_operands = 0 : i64, tpu.core_type = #tpu.core_type<tc>, window_params = [{transform_indices = @transform_0, window_bounds = array<i64: 1, 8, 128>}, {transform_indices = @transform_1, window_bounds = array<i64: 1, 1, 8>}, {transform_indices = @transform_2, window_bounds = array<i64: 1, 128, 1024>}, {transform_indices = @transform_3, window_bounds = array<i64: 1, 512, 128>}, {transform_indices = @transform_4, window_bounds = array<i64: 1, 8, 512>}, {transform_indices = @transform_5, window_bounds = array<i64: 1, 8, 128>}]} {
    %c0_i32 = arith.constant 0 : i32
    %0 = arith.cmpi eq, %arg1, %c0_i32 : i32
    %1 = arith.extui %0 : i1 to i32
    %c0_i32_0 = arith.constant 0 : i32
    %2 = arith.cmpi ne, %1, %c0_i32_0 : i32
    scf.if %2 {
      %c0_39 = arith.constant 0 : index
      %c0_40 = arith.constant 0 : index
      %c0_41 = arith.constant 0 : index
      %132 = vector.load %arg2[%c0_39, %c0_40, %c0_41] : memref<1x8x128xf32, #tpu.memory_space<vmem>>, vector<1x8x128xf32>
      %c0_42 = arith.constant 0 : index
      %c0_43 = arith.constant 0 : index
      %c0_44 = arith.constant 0 : index
      %133 = vector.load %arg7[%c0_42, %c0_43, %c0_44] : memref<1x8x128xf32, #tpu.memory_space<vmem>>, vector<1x8x128xf32>
      tpu.vector_store %arg7[%c0_42, %c0_43, %c0_44], %132 {strides = array<i32>} : memref<1x8x128xf32, #tpu.memory_space<vmem>>, vector<1x8x128xf32>,
    } else {
    }
    %c0 = arith.constant 0 : index
    %c0_1 = arith.constant 0 : index
    %c0_2 = arith.constant 0 : index
    %3 = vector.load %arg7[%c0, %c0_1, %c0_2] : memref<1x8x128xf32, #tpu.memory_space<vmem>>, vector<1x8x128xf32>
    %4 = vector.shape_cast %3 : vector<1x8x128xf32> to vector<8x128xf32>
    %c0_3 = arith.constant 0 : index
    %c0_4 = arith.constant 0 : index
    %c0_5 = arith.constant 0 : index
    %5 = vector.load %arg3[%c0_3, %c0_4, %c0_5] : memref<1x1x8xf32, #tpu.memory_space<vmem>>, vector<1x1x8xf32>
    %6 = vector.shape_cast %5 : vector<1x1x8xf32> to vector<1x8xf32>
    %c0_6 = arith.constant 0 : index
    %c0_7 = arith.constant 0 : index
    %c0_8 = arith.constant 0 : index
    %7 = vector.load %arg4[%c0_6, %c0_7, %c0_8] : memref<1x128x1024xbf16, #tpu.memory_space<vmem>>, vector<1x128x1024xbf16>
    %8 = vector.shape_cast %7 : vector<1x128x1024xbf16> to vector<128x1024xbf16>
    %c0_9 = arith.constant 0 : index
    %c0_10 = arith.constant 0 : index
    %c0_11 = arith.constant 0 : index
    %9 = vector.load %arg5[%c0_9, %c0_10, %c0_11] : memref<1x512x128xbf16, #tpu.memory_space<vmem>>, vector<1x512x128xbf16>
    %10 = vector.shape_cast %9 : vector<1x512x128xbf16> to vector<512x128xbf16>
    %c0_12 = arith.constant 0 : index
    %c0_13 = arith.constant 0 : index
    %c0_14 = arith.constant 0 : index
    %11 = vector.load %arg6[%c0_12, %c0_13, %c0_14] : memref<1x8x512xf32, #tpu.memory_space<vmem>>, vector<1x8x512xf32>
    %12 = vector.shape_cast %11 : vector<1x8x512xf32> to vector<8x512xf32>
    %13 = vector.extract_strided_slice %12 {offsets = [0, 0], sizes = [1, 384], strides = [1, 1]} : vector<8x512xf32> to vector<1x384xf32>
    %14 = vector.extract_strided_slice %12 {offsets = [1, 0], sizes = [1, 128], strides = [1, 1]} : vector<8x512xf32> to vector<1x128xf32>
    %15 = vector.extract_strided_slice %12 {offsets = [2, 0], sizes = [1, 512], strides = [1, 1]} : vector<8x512xf32> to vector<1x512xf32>
    %16 = vector.extract_strided_slice %12 {offsets = [3, 0], sizes = [1, 128], strides = [1, 1]} : vector<8x512xf32> to vector<1x128xf32>
    %17 = vector.extract_strided_slice %12 {offsets = [4, 0], sizes = [1, 128], strides = [1, 1]} : vector<8x512xf32> to vector<1x128xf32>
    %18 = vector.extract_strided_slice %12 {offsets = [5, 0], sizes = [1, 128], strides = [1, 1]} : vector<8x512xf32> to vector<1x128xf32>
    %19 = vector.extract_strided_slice %12 {offsets = [6, 0], sizes = [1, 128], strides = [1, 1]} : vector<8x512xf32> to vector<1x128xf32>
    %20 = vector.extract_strided_slice %12 {offsets = [7, 0], sizes = [1, 128], strides = [1, 1]} : vector<8x512xf32> to vector<1x128xf32>
    %21 = arith.truncf %4 : vector<8x128xf32> to vector<8x128xbf16>
    %22 = vector.extract_strided_slice %8 {offsets = [0, 0], sizes = [128, 384], strides = [1, 1]} : vector<128x1024xbf16> to vector<128x384xbf16>
    %cst = arith.constant dense<0.000000e+00> : vector<8x384xf32>
    %23 = tpu.matmul %21, %22, %cst {dimension_numbers = #tpu.dot_dimension_numbers<[1], [0], [0], [1], [0, 0, 1, 1], [], []>} : vector<8x128xbf16>, vector<128x384xbf16>, vector<8x384xf32> -> vector<8x384xf32>
    %24 = vector.broadcast %13 : vector<1x384xf32> to vector<8x384xf32>
    %25 = arith.addf %23, %24 : vector<8x384xf32>
    %26 = vector.extract_strided_slice %25 {offsets = [0, 0], sizes = [8, 128], strides = [1, 1]} : vector<8x384xf32> to vector<8x128xf32>
    %27 = vector.shape_cast %26 : vector<8x128xf32> to vector<8x4x32xf32>
    %28 = tpu.transpose %27, [1, 0, 2] : vector<8x4x32xf32> -> vector<4x8x32xf32>
    %29 = arith.truncf %28 : vector<4x8x32xf32> to vector<4x8x32xbf16>
    %30 = vector.extract_strided_slice %25 {offsets = [0, 128], sizes = [8, 128], strides = [1, 1]} : vector<8x384xf32> to vector<8x128xf32>
    %31 = vector.shape_cast %30 : vector<8x128xf32> to vector<8x4x32xf32>
    %32 = tpu.transpose %31, [1, 0, 2] : vector<8x4x32xf32> -> vector<4x8x32xf32>
    %33 = arith.truncf %32 : vector<4x8x32xf32> to vector<4x8x32xbf16>
    %34 = vector.extract_strided_slice %25 {offsets = [0, 256], sizes = [8, 128], strides = [1, 1]} : vector<8x384xf32> to vector<8x128xf32>
    %35 = vector.shape_cast %34 : vector<8x128xf32> to vector<8x4x32xf32>
    %36 = tpu.transpose %35, [1, 0, 2] : vector<8x4x32xf32> -> vector<4x8x32xf32>
    %37 = arith.truncf %36 : vector<4x8x32xf32> to vector<4x8x32xbf16>
    "tpu.trace_start"() <{level = 10 : i32, message = "nsd,ntd->nst"}> : () -> ()
    %cst_15 = arith.constant dense<0.000000e+00> : vector<4x8x8xf32>
    %38 = tpu.matmul %29, %33, %cst_15 {dimension_numbers = #tpu.dot_dimension_numbers<[2], [2], [1], [1], [0, 0, 0, 1, 1, 1], [0], [0]>} : vector<4x8x32xbf16>, vector<4x8x32xbf16>, vector<4x8x8xf32> -> vector<4x8x8xf32>
    "tpu.trace_stop"() : () -> ()
    %39 = vector.shape_cast %6 : vector<1x8xf32> to vector<1x1x8xf32>
    %40 = vector.broadcast %39 : vector<1x1x8xf32> to vector<4x8x8xf32>
    %41 = arith.addf %38, %40 : vector<4x8x8xf32>
    %cst_16 = arith.constant dense<0xFF800000> : vector<4x8xf32>
    %42 = vector.multi_reduction <maximumf>, %41, %cst_16 [2] : vector<4x8x8xf32> to vector<4x8xf32>
    %43 = vector.shape_cast %42 : vector<4x8xf32> to vector<4x8x1xf32>
    %44 = vector.broadcast %43 : vector<4x8x1xf32> to vector<4x8x8xf32>
    %45 = arith.subf %41, %44 : vector<4x8x8xf32>
    %46 = math.exp %45 : vector<4x8x8xf32>
    %cst_17 = arith.constant dense<0.000000e+00> : vector<4x8xf32>
    %47 = vector.multi_reduction <add>, %46, %cst_17 [2] : vector<4x8x8xf32> to vector<4x8xf32>
    %48 = vector.shape_cast %47 : vector<4x8xf32> to vector<4x8x1xf32>
    %49 = tpu.reciprocal %48 {approx = true} : vector<4x8x1xf32> -> vector<4x8x1xf32>
    %50 = vector.broadcast %49 : vector<4x8x1xf32> to vector<4x8x8xf32>
    %51 = arith.mulf %46, %50 : vector<4x8x8xf32>
    %52 = arith.truncf %51 : vector<4x8x8xf32> to vector<4x8x8xbf16>
    "tpu.trace_start"() <{level = 10 : i32, message = "nst,ntd->nsd"}> : () -> ()
    %cst_18 = arith.constant dense<0.000000e+00> : vector<4x8x32xf32>
    %53 = tpu.matmul %52, %37, %cst_18 {dimension_numbers = #tpu.dot_dimension_numbers<[2], [1], [1], [2], [0, 0, 0, 1, 1, 2], [0], [0]>} : vector<4x8x8xbf16>, vector<4x8x32xbf16>, vector<4x8x32xf32> -> vector<4x8x32xf32>
    "tpu.trace_stop"() : () -> ()
    %54 = tpu.transpose %53, [1, 0, 2] : vector<4x8x32xf32> -> vector<8x4x32xf32>
    %55 = vector.shape_cast %54 : vector<8x4x32xf32> to vector<8x128xf32>
    %56 = arith.truncf %55 : vector<8x128xf32> to vector<8x128xbf16>
    %57 = vector.extract_strided_slice %8 {offsets = [0, 384], sizes = [128, 128], strides = [1, 1]} : vector<128x1024xbf16> to vector<128x128xbf16>
    %cst_19 = arith.constant dense<0.000000e+00> : vector<8x128xf32>
    %58 = tpu.matmul %56, %57, %cst_19 {dimension_numbers = #tpu.dot_dimension_numbers<[1], [0], [0], [1], [0, 0, 1, 1], [], []>} : vector<8x128xbf16>, vector<128x128xbf16>, vector<8x128xf32> -> vector<8x128xf32>
    %59 = vector.broadcast %14 : vector<1x128xf32> to vector<8x128xf32>
    %60 = arith.addf %58, %59 : vector<8x128xf32>
    %61 = arith.addf %4, %60 : vector<8x128xf32>
    %cst_20 = arith.constant dense<0.000000e+00> : vector<8xf32>
    %62 = vector.multi_reduction <add>, %61, %cst_20 [1] : vector<8x128xf32> to vector<8xf32>
    %63 = vector.shape_cast %62 : vector<8xf32> to vector<8x1xf32>
    %cst_21 = arith.constant 1.280000e+02 : f32
    %64 = vector.broadcast %cst_21 : f32 to vector<8x1xf32>
    %65 = arith.divf %63, %64 : vector<8x1xf32>
    %66 = vector.broadcast %65 : vector<8x1xf32> to vector<8x128xf32>
    %67 = arith.subf %61, %66 : vector<8x128xf32>
    %68 = arith.mulf %67, %67 : vector<8x128xf32>
    %cst_22 = arith.constant dense<0.000000e+00> : vector<8xf32>
    %69 = vector.multi_reduction <add>, %68, %cst_22 [1] : vector<8x128xf32> to vector<8xf32>
    %70 = vector.shape_cast %69 : vector<8xf32> to vector<8x1xf32>
    %cst_23 = arith.constant 1.280000e+02 : f32
    %71 = vector.broadcast %cst_23 : f32 to vector<8x1xf32>
    %72 = arith.divf %70, %71 : vector<8x1xf32>
    %73 = vector.broadcast %65 : vector<8x1xf32> to vector<8x128xf32>
    %74 = arith.subf %61, %73 : vector<8x128xf32>
    %cst_24 = arith.constant 9.99999996E-13 : f32
    %75 = vector.broadcast %cst_24 : f32 to vector<8x1xf32>
    %76 = arith.addf %72, %75 : vector<8x1xf32>
    %77 = math.rsqrt %76 : vector<8x1xf32>
    %78 = vector.broadcast %77 : vector<8x1xf32> to vector<8x128xf32>
    %79 = arith.mulf %74, %78 : vector<8x128xf32>
    %80 = vector.broadcast %17 : vector<1x128xf32> to vector<8x128xf32>
    %81 = arith.mulf %79, %80 : vector<8x128xf32>
    %82 = vector.broadcast %18 : vector<1x128xf32> to vector<8x128xf32>
    %83 = arith.addf %81, %82 : vector<8x128xf32>
    %84 = arith.truncf %83 : vector<8x128xf32> to vector<8x128xbf16>
    %85 = vector.extract_strided_slice %8 {offsets = [0, 512], sizes = [128, 512], strides = [1, 1]} : vector<128x1024xbf16> to vector<128x512xbf16>
    %cst_25 = arith.constant dense<0.000000e+00> : vector<8x512xf32>
    %86 = tpu.matmul %84, %85, %cst_25 {dimension_numbers = #tpu.dot_dimension_numbers<[1], [0], [0], [1], [0, 0, 1, 1], [], []>} : vector<8x128xbf16>, vector<128x512xbf16>, vector<8x512xf32> -> vector<8x512xf32>
    %87 = vector.broadcast %15 : vector<1x512xf32> to vector<8x512xf32>
    %88 = arith.addf %86, %87 : vector<8x512xf32>
    %89 = arith.mulf %88, %88 : vector<8x512xf32>
    %90 = arith.mulf %88, %89 : vector<8x512xf32>
    %cst_26 = arith.constant 4.471500e-02 : f32
    %91 = vector.broadcast %cst_26 : f32 to vector<8x512xf32>
    %92 = arith.mulf %91, %90 : vector<8x512xf32>
    %93 = arith.addf %88, %92 : vector<8x512xf32>
    %cst_27 = arith.constant 0.797884583 : f32
    %94 = vector.broadcast %cst_27 : f32 to vector<8x512xf32>
    %95 = arith.mulf %94, %93 : vector<8x512xf32>
    %96 = math.tanh %95 : vector<8x512xf32>
    %cst_28 = arith.constant 1.000000e+00 : f32
    %97 = vector.broadcast %cst_28 : f32 to vector<8x512xf32>
    %98 = arith.addf %97, %96 : vector<8x512xf32>
    %cst_29 = arith.constant 5.000000e-01 : f32
    %99 = vector.broadcast %cst_29 : f32 to vector<8x512xf32>
    %100 = arith.mulf %99, %98 : vector<8x512xf32>
    %101 = arith.mulf %88, %100 : vector<8x512xf32>
    %102 = arith.truncf %101 : vector<8x512xf32> to vector<8x512xbf16>
    %cst_30 = arith.constant dense<0.000000e+00> : vector<8x128xf32>
    %103 = tpu.matmul %102, %10, %cst_30 {dimension_numbers = #tpu.dot_dimension_numbers<[1], [0], [0], [1], [0, 0, 1, 1], [], []>} : vector<8x512xbf16>, vector<512x128xbf16>, vector<8x128xf32> -> vector<8x128xf32>
    %104 = vector.broadcast %16 : vector<1x128xf32> to vector<8x128xf32>
    %105 = arith.addf %103, %104 : vector<8x128xf32>
    %106 = arith.addf %83, %105 : vector<8x128xf32>
    %cst_31 = arith.constant dense<0.000000e+00> : vector<8xf32>
    %107 = vector.multi_reduction <add>, %106, %cst_31 [1] : vector<8x128xf32> to vector<8xf32>
    %108 = vector.shape_cast %107 : vector<8xf32> to vector<8x1xf32>
    %cst_32 = arith.constant 1.280000e+02 : f32
    %109 = vector.broadcast %cst_32 : f32 to vector<8x1xf32>
    %110 = arith.divf %108, %109 : vector<8x1xf32>
    %111 = vector.broadcast %110 : vector<8x1xf32> to vector<8x128xf32>
    %112 = arith.subf %106, %111 : vector<8x128xf32>
    %113 = arith.mulf %112, %112 : vector<8x128xf32>
    %cst_33 = arith.constant dense<0.000000e+00> : vector<8xf32>
    %114 = vector.multi_reduction <add>, %113, %cst_33 [1] : vector<8x128xf32> to vector<8xf32>
    %115 = vector.shape_cast %114 : vector<8xf32> to vector<8x1xf32>
    %cst_34 = arith.constant 1.280000e+02 : f32
    %116 = vector.broadcast %cst_34 : f32 to vector<8x1xf32>
    %117 = arith.divf %115, %116 : vector<8x1xf32>
    %118 = vector.broadcast %110 : vector<8x1xf32> to vector<8x128xf32>
    %119 = arith.subf %106, %118 : vector<8x128xf32>
    %cst_35 = arith.constant 9.99999996E-13 : f32
    %120 = vector.broadcast %cst_35 : f32 to vector<8x1xf32>
    %121 = arith.addf %117, %120 : vector<8x1xf32>
    %122 = math.rsqrt %121 : vector<8x1xf32>
    %123 = vector.broadcast %122 : vector<8x1xf32> to vector<8x128xf32>
    %124 = arith.mulf %119, %123 : vector<8x128xf32>
    %125 = vector.broadcast %19 : vector<1x128xf32> to vector<8x128xf32>
    %126 = arith.mulf %124, %125 : vector<8x128xf32>
    %127 = vector.broadcast %20 : vector<1x128xf32> to vector<8x128xf32>
    %128 = arith.addf %126, %127 : vector<8x128xf32>
    %c0_36 = arith.constant 0 : index
    %c0_37 = arith.constant 0 : index
    %c0_38 = arith.constant 0 : index
    %129 = vector.load %arg7[%c0_36, %c0_37, %c0_38] : memref<1x8x128xf32, #tpu.memory_space<vmem>>, vector<1x8x128xf32>
    %130 = vector.shape_cast %129 : vector<1x8x128xf32> to vector<8x128xf32>
    %131 = vector.shape_cast %128 : vector<8x128xf32> to vector<1x8x128xf32>
    tpu.vector_store %arg7[%c0_36, %c0_37, %c0_38], %131 {strides = array<i32>} : memref<1x8x128xf32, #tpu.memory_space<vmem>>, vector<1x8x128xf32>,
    return
  }
  func.func @transform_0(%arg0: i32, %arg1: i32) -> (i32, i32, i32) {
    %c0_i32 = arith.constant 0 : i32
    %c0_i32_0 = arith.constant 0 : i32
    %c0_i32_1 = arith.constant 0 : i32
    return %arg0, %c0_i32, %c0_i32_0 : i32, i32, i32
  }
  func.func @transform_1(%arg0: i32, %arg1: i32) -> (i32, i32, i32) {
    %c0_i32 = arith.constant 0 : i32
    %c0_i32_0 = arith.constant 0 : i32
    %c0_i32_1 = arith.constant 0 : i32
    return %arg0, %c0_i32, %c0_i32_0 : i32, i32, i32
  }
  func.func @transform_2(%arg0: i32, %arg1: i32) -> (i32, i32, i32) {
    %c0_i32 = arith.constant 0 : i32
    %c0_i32_0 = arith.constant 0 : i32
    %c0_i32_1 = arith.constant 0 : i32
    return %arg1, %c0_i32, %c0_i32_0 : i32, i32, i32
  }
  func.func @transform_3(%arg0: i32, %arg1: i32) -> (i32, i32, i32) {
    %c0_i32 = arith.constant 0 : i32
    %c0_i32_0 = arith.constant 0 : i32
    %c0_i32_1 = arith.constant 0 : i32
    return %arg1, %c0_i32, %c0_i32_0 : i32, i32, i32
  }
  func.func @transform_4(%arg0: i32, %arg1: i32) -> (i32, i32, i32) {
    %c0_i32 = arith.constant 0 : i32
    %c0_i32_0 = arith.constant 0 : i32
    %c0_i32_1 = arith.constant 0 : i32
    return %arg1, %c0_i32, %c0_i32_0 : i32, i32, i32
  }
  func.func @transform_5(%arg0: i32, %arg1: i32) -> (i32, i32, i32) {
    %c0_i32 = arith.constant 0 : i32
    %c0_i32_0 = arith.constant 0 : i32
    %c0_i32_1 = arith.constant 0 : i32
    return %arg0, %c0_i32, %c0_i32_0 : i32, i32, i32
  }
}

</mosaic_0001>

<llo_original>
// kernel: tpu_custom_call.1
$region0: #{tpu_custom_call.1}
  #allocation0 [shape = 'u32[]', space=smem, size = 0x4, offset = 0x4, fixed_abs, tag = 'smem constant byte address 0x4 - core index']
  #allocation1 [shape = 'u32[144,128]{1,0:T(1,128)}', space=vmem, size = 0x12000, scoped, tag = 'internal scratch']
  %s0 = inlined_call_operand.hbm [shape: f32[2,8,128], index: 0, kind: input, shape index: {}]
  %s1 = inlined_call_operand.vmem [shape: f32[2,1,8], index: 1, kind: input, shape index: {}]
  %s2 = inlined_call_operand.hbm [shape: bf16[2,128,1024], index: 2, kind: input, shape index: {}]
  %s3 = inlined_call_operand.hbm [shape: bf16[2,512,128], index: 3, kind: input, shape index: {}]
  %s4 = inlined_call_operand.hbm [shape: f32[2,8,512], index: 4, kind: input, shape index: {}]
  %s5 = inlined_call_operand.hbm [shape: f32[2,8,128], index: 5, kind: output, shape index: {}]
  %s6 = sld [smem:[#allocation0]]
  $region73: #{tpu_custom_call.1} parent=0
    _
  %s8 = ssub.s32 1, %s6
  %s9 = scalar_select 0, %s8, %s6
  $region1: #{tpu_custom_call.1} parent=0
    #allocation2 [shape = 'u8[8192]{0}', space=vmem, size = 0x2000, scoped, tag = 'input window, operand 0']
    #allocation3 [shape = 's32[2]{0}', space=sflag, size = 0x8, scoped, tag = 'scoped memory for tpu_custom_call.1']
    #allocation4 [shape = 's32[2]{0}', space=sflag, size = 0x8, scoped, tag = 'scoped memory for tpu_custom_call.1']
    #allocation5 [shape = 'u8[524288]{0}', space=vmem, size = 0x80000, scoped, tag = 'input window, operand 2']
    #allocation6 [shape = 's32[2]{0}', space=sflag, size = 0x8, scoped, tag = 'scoped memory for tpu_custom_call.1']
    #allocation7 [shape = 'u8[262144]{0}', space=vmem, size = 0x40000, scoped, tag = 'input window, operand 3']
    #allocation8 [shape = 'u8[32768]{0}', space=vmem, size = 0x8000, scoped, tag = 'input window, operand 4']
    #allocation9 [shape = 's32[2]{0}', space=sflag, size = 0x8, scoped, tag = 'scoped memory for tpu_custom_call.1']
    #allocation10 [shape = 'u8[8192]{0}', space=vmem, size = 0x2000, scoped, tag = 'output window, operand 0']
    %10 = vsyncpa [#allocation3], 0
    %s11 = scalar_lea.sflag [#allocation3], 1
    %12 = vsyncpa %s11, 0
    %13 = vsyncpa [#allocation6], 0
    %s14 = scalar_lea.sflag [#allocation6], 1
    %15 = vsyncpa %s14, 0
    %16 = vsyncpa [#allocation9], 0
    %s17 = scalar_lea.sflag [#allocation9], 1
    %18 = vsyncpa %s17, 0
    %19 = vsyncpa [#allocation4], 0
    %s20 = scalar_lea.sflag [#allocation4], 1
    %21 = vsyncpa %s20, 0
    loop: start=0, step=1, limit=6
    $region2: #{tpu_custom_call.1} parent=1 // loop_pre_header
      _
    $region3: #{tpu_custom_call.1} parent=1 // loop_header
      %s23 = sphi 0, %s27
      %p24 = scmp.ge.s32.totalorder %s23, 6
      %s30 = sphi 0, %s42
      %s31 = sphi 0, %s38
      %s32 = sphi 0, %s30
      %s33 = sphi 0, %s31
      %s34 = sphi 0, %s32
      %s35 = sphi 0, %s33
      %s45 = sphi 0, %s47
      %s48 = sphi 0, %s45
      %s49 = sphi 0, %s48
      %s65 = sphi 0, %s49
      %s71 = sphi 0, %s73
      %s74 = sphi 0, %s71
      %s75 = sphi 0, %s74
      %s91 = sphi 0, %s75
      %s97 = sphi 0, %s99
      %s100 = sphi 0, %s97
      %s101 = sphi 0, %s100
      %s117 = sphi 0, %s101
      %s123 = sphi 0, %s125
      %s126 = sphi 0, %s123
      %s127 = sphi 0, %s126
      %s143 = sphi 0, %s127
      %s149 = sphi 0, %s151
      %s152 = sphi 0, %s149
      %s153 = sphi 0, %s152
      %s169 = sphi 0, %s153
      %s175 = sphi 0, %s177
      %s178 = sphi 0, %s175
      %s179 = sphi 0, %s178
      %s195 = sphi 0, %s179
    $region4: #{tpu_custom_call.1} parent=1 // loop_header_branch
      %26 = sbr.rel (%p24) target = $region8
    $region5: #{tpu_custom_call.1} parent=1 // loop_body
      %s28 = ssub.s32 %s23, 1
      %s29 = ssub.s32 %s23, 2
      %s36 = sadd.s32 1, %s31
      %p37 = scmp.ge.s32.totalorder %s36, 2
      %s38 = scalar_select %p37, 0, %s36
      %s39 = sadd.s32 1, %s30
      %s40 = scalar_select %p37, %s39, %s30
      %p41 = scmp.ge.s32.totalorder %s40, 2
      %s42 = scalar_select %p41, 0, %s40
      %s43 = ssub.s32 %s30, %s42
      %p44 = scmp.eq.s32.totalorder %s43, 0
      %s46 = sadd.s32 %s45, 1
      %s47 = scalar_select %p44, %s45, %s46
      %p50 = pneg %p44
      %p51 = scmp.eq.s32.totalorder %s23, 3
      %p52 = por %p50, %p51
      %p53 = scmp.ne.s32.totalorder %s45, %s48
      %p54 = scmp.eq.s32.totalorder %s23, 0
      %p55 = por %p53, %p54
      %p56 = scmp.ne.s32.totalorder %s45, %s48
      %p57 = scmp.eq.s32.totalorder %s28, 3
      %p58 = por %p56, %p57
      %p59 = scmp.ne.s32.totalorder %s48, %s49
      %p60 = scmp.eq.s32.totalorder %s28, 0
      %p61 = por %p59, %p60
      %p62 = scmp.ne.s32.totalorder %s48, %s49
      %p63 = scmp.eq.s32.totalorder %s29, 3
      %p64 = por %p62, %p63
      %p66 = scmp.ne.s32.totalorder %s49, %s65
      %p67 = scmp.eq.s32.totalorder %s29, 0
      %p68 = por %p66, %p67
      %s69 = ssub.s32 %s30, %s42
      %p70 = scmp.eq.s32.totalorder %s69, 0
      %s72 = sadd.s32 %s71, 1
      %s73 = scalar_select %p70, %s71, %s72
      %p76 = pneg %p70
      %p77 = scmp.eq.s32.totalorder %s23, 3
      %p78 = por %p76, %p77
      %p79 = scmp.ne.s32.totalorder %s71, %s74
      %p80 = scmp.eq.s32.totalorder %s23, 0
      %p81 = por %p79, %p80
      %p82 = scmp.ne.s32.totalorder %s71, %s74
      %p83 = scmp.eq.s32.totalorder %s28, 3
      %p84 = por %p82, %p83
      %p85 = scmp.ne.s32.totalorder %s74, %s75
      %p86 = scmp.eq.s32.totalorder %s28, 0
      %p87 = por %p85, %p86
      %p88 = scmp.ne.s32.totalorder %s74, %s75
      %p89 = scmp.eq.s32.totalorder %s29, 3
      %p90 = por %p88, %p89
      %p92 = scmp.ne.s32.totalorder %s75, %s91
      %p93 = scmp.eq.s32.totalorder %s29, 0
      %p94 = por %p92, %p93
      %s95 = ssub.s32 %s31, %s38
      %p96 = scmp.eq.s32.totalorder %s95, 0
      %s98 = sadd.s32 %s97, 1
      %s99 = scalar_select %p96, %s97, %s98
      %p102 = pneg %p96
      %p103 = scmp.eq.s32.totalorder %s23, 3
      %p104 = por %p102, %p103
      %p105 = scmp.ne.s32.totalorder %s97, %s100
      %p106 = scmp.eq.s32.totalorder %s23, 0
      %p107 = por %p105, %p106
      %p108 = scmp.ne.s32.totalorder %s97, %s100
      %p109 = scmp.eq.s32.totalorder %s28, 3
      %p110 = por %p108, %p109
      %p111 = scmp.ne.s32.totalorder %s100, %s101
      %p112 = scmp.eq.s32.totalorder %s28, 0
      %p113 = por %p111, %p112
      %p114 = scmp.ne.s32.totalorder %s100, %s101
      %p115 = scmp.eq.s32.totalorder %s29, 3
      %p116 = por %p114, %p115
      %p118 = scmp.ne.s32.totalorder %s101, %s117
      %p119 = scmp.eq.s32.totalorder %s29, 0
      %p120 = por %p118, %p119
      %s121 = ssub.s32 %s31, %s38
      %p122 = scmp.eq.s32.totalorder %s121, 0
      %s124 = sadd.s32 %s123, 1
      %s125 = scalar_select %p122, %s123, %s124
      %p128 = pneg %p122
      %p129 = scmp.eq.s32.totalorder %s23, 3
      %p130 = por %p128, %p129
      %p131 = scmp.ne.s32.totalorder %s123, %s126
      %p132 = scmp.eq.s32.totalorder %s23, 0
      %p133 = por %p131, %p132
      %p134 = scmp.ne.s32.totalorder %s123, %s126
      %p135 = scmp.eq.s32.totalorder %s28, 3
      %p136 = por %p134, %p135
      %p137 = scmp.ne.s32.totalorder %s126, %s127
      %p138 = scmp.eq.s32.totalorder %s28, 0
      %p139 = por %p137, %p138
      %p140 = scmp.ne.s32.totalorder %s126, %s127
      %p141 = scmp.eq.s32.totalorder %s29, 3
      %p142 = por %p140, %p141
      %p144 = scmp.ne.s32.totalorder %s127, %s143
      %p145 = scmp.eq.s32.totalorder %s29, 0
      %p146 = por %p144, %p145
      %s147 = ssub.s32 %s31, %s38
      %p148 = scmp.eq.s32.totalorder %s147, 0
      %s150 = sadd.s32 %s149, 1
      %s151 = scalar_select %p148, %s149, %s150
      %p154 = pneg %p148
      %p155 = scmp.eq.s32.totalorder %s23, 3
      %p156 = por %p154, %p155
      %p157 = scmp.ne.s32.totalorder %s149, %s152
      %p158 = scmp.eq.s32.totalorder %s23, 0
      %p159 = por %p157, %p158
      %p160 = scmp.ne.s32.totalorder %s149, %s152
      %p161 = scmp.eq.s32.totalorder %s28, 3
      %p162 = por %p160, %p161
      %p163 = scmp.ne.s32.totalorder %s152, %s153
      %p164 = scmp.eq.s32.totalorder %s28, 0
      %p165 = por %p163, %p164
      %p166 = scmp.ne.s32.totalorder %s152, %s153
      %p167 = scmp.eq.s32.totalorder %s29, 3
      %p168 = por %p166, %p167
      %p170 = scmp.ne.s32.totalorder %s153, %s169
      %p171 = scmp.eq.s32.totalorder %s29, 0
      %p172 = por %p170, %p171
      %s173 = ssub.s32 %s30, %s42
      %p174 = scmp.eq.s32.totalorder %s173, 0
      %s176 = sadd.s32 %s175, 1
      %s177 = scalar_select %p174, %s175, %s176
      %p180 = pneg %p174
      %p181 = scmp.eq.s32.totalorder %s23, 3
      %p182 = por %p180, %p181
      %p183 = scmp.ne.s32.totalorder %s175, %s178
      %p184 = scmp.eq.s32.totalorder %s23, 0
      %p185 = por %p183, %p184
      %p186 = scmp.ne.s32.totalorder %s175, %s178
      %p187 = scmp.eq.s32.totalorder %s28, 3
      %p188 = por %p186, %p187
      %p189 = scmp.ne.s32.totalorder %s178, %s179
      %p190 = scmp.eq.s32.totalorder %s28, 0
      %p191 = por %p189, %p190
      %p192 = scmp.ne.s32.totalorder %s178, %s179
      %p193 = scmp.eq.s32.totalorder %s29, 3
      %p194 = por %p192, %p193
      %p196 = scmp.ne.s32.totalorder %s179, %s195
      %p197 = scmp.eq.s32.totalorder %s29, 0
      %p198 = por %p196, %p197
      %p199 = scmp.le.s32.totalorder 1, %s23
      %p200 = scmp.lt.s32.totalorder %s23, 5
      %p201 = pnand %p199, %p200
      %p202 = pneg %p201
      // Predicated region
      $region9: #{tpu_custom_call.1} parent=5 // pred_check
        _
      $region10: #{tpu_custom_call.1} parent=5 // pred_check_branch
        %204 = sbr.rel (%p201) target = $region12
      $region11: #{tpu_custom_call.1} parent=5 // pred_region
        %s205 = ssub.s32 %s23, 1
      $region12: #{tpu_custom_call.1} parent=5 // pred_fallthru
        _
      %p206 = scmp.lt.s32.totalorder %s23, 4
      // Predicated region
      $region13: #{tpu_custom_call.1} parent=5 // pred_check
        %p207 = pneg %p206
      $region14: #{tpu_custom_call.1} parent=5 // pred_check_branch
        %209 = sbr.rel (%p207) target = $region16
      $region15: #{tpu_custom_call.1} parent=5 // pred_region
        // Predicated region
        $region17: #{tpu_custom_call.1} parent=15 // pred_check
          %p210 = pneg %p55
        $region18: #{tpu_custom_call.1} parent=15 // pred_check_branch
          %212 = sbr.rel (%p210) target = $region20
        $region19: #{tpu_custom_call.1} parent=15 // pred_region
          %s213 = sand.u32 %s45, 1
          %s214 = scalar_lea.sflag [#allocation3], %s213
          %s215 = sand.u32 %s45, 1
          %s216 = smul.addr %s215, 8
          %s217 = scalar_lea.vmem [#allocation2], %s216
          %s219 = ssub.s32 128, 128
          %220 = vsyncadd %s214, %s219
          %s221 = smul.addr %s30, 128
          %s222 = scalar_lea.hbm %s0, %s221
          %s224 = sshll.u32 %s217, 4
          %s225 = int_to_ptr.vmem [resolvable:$true] %s224
          %227 = dma.hbm_to_vmem [thread:$0]  %s222, 128, %s225, %s214
        $region20: #{tpu_custom_call.1} parent=15 // pred_fallthru
          _
        // Predicated region
        $region21: #{tpu_custom_call.1} parent=15 // pred_check
          %p228 = pneg %p81
        $region22: #{tpu_custom_call.1} parent=15 // pred_check_branch
          %230 = sbr.rel (%p228) target = $region24
        $region23: #{tpu_custom_call.1} parent=15 // pred_region
          %p231 = scmp.lt.s32.totalorder %s30, 1
          %s232 = scalar_select %p231, %s30, 1
          %s233 = scalar_lea.vmem %s1, %s232
        $region24: #{tpu_custom_call.1} parent=15 // pred_fallthru
          _
        // Predicated region
        $region25: #{tpu_custom_call.1} parent=15 // pred_check
          %p234 = pneg %p107
        $region26: #{tpu_custom_call.1} parent=15 // pred_check_branch
          %236 = sbr.rel (%p234) target = $region28
        $region27: #{tpu_custom_call.1} parent=15 // pred_region
          %s237 = sand.u32 %s23, 1
          %s238 = scalar_lea.sflag [#allocation6], %s237
          %s239 = sand.u32 %s97, 1
          %s240 = smul.addr %s239, 512
          %s241 = scalar_lea.vmem [#allocation5], %s240
          %s243 = ssub.s32 8192, 8192
          %244 = vsyncadd %s238, %s243
          %s245 = smul.addr %s31, 128
          %s246 = smul.addr %s245, 64
          %s247 = scalar_lea.hbm %s2, %s246
          %s248 = sshll.u32 %s241, 4
          %s249 = int_to_ptr.vmem [resolvable:$true] %s248
          %254 = dma.hbm_to_vmem [thread:$0]  %s247, 8192, %s249, %s238, 512, 512, 32
        $region28: #{tpu_custom_call.1} parent=15 // pred_fallthru
          _
        // Predicated region
        $region29: #{tpu_custom_call.1} parent=15 // pred_check
          %p255 = pneg %p133
        $region30: #{tpu_custom_call.1} parent=15 // pred_check_branch
          %257 = sbr.rel (%p255) target = $region32
        $region31: #{tpu_custom_call.1} parent=15 // pred_region
          %s258 = sand.u32 %s23, 1
          %s259 = scalar_lea.sflag [#allocation6], %s258
          %s260 = sand.u32 %s123, 1
          %s261 = smul.addr %s260, 256
          %s262 = scalar_lea.vmem [#allocation7], %s261
          %s264 = ssub.s32 4096, 4096
          %265 = vsyncadd %s259, %s264
          %s266 = smul.addr %s31, 64
          %s267 = smul.addr %s266, 64
          %s268 = scalar_lea.hbm %s3, %s267
          %s269 = sshll.u32 %s262, 4
          %s270 = int_to_ptr.vmem [resolvable:$true] %s269
          %275 = dma.hbm_to_vmem [thread:$0]  %s268, 4096, %s270, %s259, 64, 64, 4
        $region32: #{tpu_custom_call.1} parent=15 // pred_fallthru
          _
        // Predicated region
        $region33: #{tpu_custom_call.1} parent=15 // pred_check
          %p276 = pneg %p159
        $region34: #{tpu_custom_call.1} parent=15 // pred_check_branch
          %278 = sbr.rel (%p276) target = $region36
        $region35: #{tpu_custom_call.1} parent=15 // pred_region
          %s279 = sand.u32 %s149, 1
          %s280 = scalar_lea.sflag [#allocation9], %s279
          %s281 = sand.u32 %s149, 1
          %s282 = smul.addr %s281, 32
          %s283 = scalar_lea.vmem [#allocation8], %s282
          %s285 = ssub.s32 512, 512
          %286 = vsyncadd %s280, %s285
          %s287 = smul.addr %s31, 4
          %s288 = smul.addr %s287, 128
          %s289 = scalar_lea.hbm %s4, %s288
          %s291 = sshll.u32 %s283, 4
          %s292 = int_to_ptr.vmem [resolvable:$true] %s291
          %294 = dma.hbm_to_vmem [thread:$0]  %s289, 512, %s292, %s280
        $region36: #{tpu_custom_call.1} parent=15 // pred_fallthru
          _
      $region16: #{tpu_custom_call.1} parent=5 // pred_fallthru
        _
      %p295 = scmp.le.s32.totalorder 1, %s23
      %p296 = scmp.lt.s32.totalorder %s23, 5
      %p297 = pnand %p295, %p296
      %p298 = pneg %p297
      // Predicated region
      $region37: #{tpu_custom_call.1} parent=5 // pred_check
        _
      $region38: #{tpu_custom_call.1} parent=5 // pred_check_branch
        %300 = sbr.rel (%p297) target = $region40
      $region39: #{tpu_custom_call.1} parent=5 // pred_region
        %s301 = ssub.s32 %s23, 1
        %s302 = sand.u32 %s48, 1
        %s303 = scalar_lea.sflag [#allocation3], %s302
        %s304 = sand.u32 %s48, 1
        %s305 = smul.addr %s304, 8
        %s306 = scalar_lea.vmem [#allocation2], %s305
        // Predicated region
        $region41: #{tpu_custom_call.1} parent=39 // pred_check
          %p307 = pneg %p61
        $region42: #{tpu_custom_call.1} parent=39 // pred_check_branch
          %309 = sbr.rel (%p307) target = $region44
        $region43: #{tpu_custom_call.1} parent=39 // pred_region
          %310 = dma.done %s303, 128
        $region44: #{tpu_custom_call.1} parent=39 // pred_fallthru
          _
        %s311 = sand.u32 %s28, 1
        %s312 = scalar_lea.sflag [#allocation6], %s311
        %s313 = sand.u32 %s100, 1
        %s314 = smul.addr %s313, 512
        %s315 = scalar_lea.vmem [#allocation5], %s314
        // Predicated region
        $region45: #{tpu_custom_call.1} parent=39 // pred_check
          %p316 = pneg %p113
        $region46: #{tpu_custom_call.1} parent=39 // pred_check_branch
          %318 = sbr.rel (%p316) target = $region48
        $region47: #{tpu_custom_call.1} parent=39 // pred_region
          %319 = dma.done %s312, 8192
        $region48: #{tpu_custom_call.1} parent=39 // pred_fallthru
          _
        %s320 = sand.u32 %s28, 1
        %s321 = scalar_lea.sflag [#allocation6], %s320
        %s322 = sand.u32 %s126, 1
        %s323 = smul.addr %s322, 256
        %s324 = scalar_lea.vmem [#allocation7], %s323
        // Predicated region
        $region49: #{tpu_custom_call.1} parent=39 // pred_check
          %p325 = pneg %p139
        $region50: #{tpu_custom_call.1} parent=39 // pred_check_branch
          %327 = sbr.rel (%p325) target = $region52
        $region51: #{tpu_custom_call.1} parent=39 // pred_region
          %328 = dma.done %s321, 4096
        $region52: #{tpu_custom_call.1} parent=39 // pred_fallthru
          _
        %s329 = sand.u32 %s152, 1
        %s330 = scalar_lea.sflag [#allocation9], %s329
        %s331 = sand.u32 %s152, 1
        %s332 = smul.addr %s331, 32
        %s333 = scalar_lea.vmem [#allocation8], %s332
        // Predicated region
        $region53: #{tpu_custom_call.1} parent=39 // pred_check
          %p334 = pneg %p165
        $region54: #{tpu_custom_call.1} parent=39 // pred_check_branch
          %336 = sbr.rel (%p334) target = $region56
        $region55: #{tpu_custom_call.1} parent=39 // pred_region
          %337 = dma.done %s330, 512
        $region56: #{tpu_custom_call.1} parent=39 // pred_fallthru
          _
        %s338 = sand.u32 %s48, 1
        %s339 = scalar_lea.sflag [#allocation3], %s338
        %s340 = sand.u32 %s48, 1
        %s341 = smul.addr %s340, 8
        %s342 = scalar_lea.vmem [#allocation2], %s341
        %p343 = pneg %p61
        %p344 = pneg %p58
        %p345 = scmp.lt.s32.totalorder %s32, 1
        %s346 = scalar_select %p345, %s32, 1
        %s347 = scalar_lea.vmem %s1, %s346
        %p348 = pneg %p87
        %p349 = pneg %p84
        %s350 = sand.u32 %s28, 1
        %s351 = scalar_lea.sflag [#allocation6], %s350
        %s352 = sand.u32 %s100, 1
        %s353 = smul.addr %s352, 512
        %s354 = scalar_lea.vmem [#allocation5], %s353
        %p355 = pneg %p113
        %p356 = pneg %p110
        %s357 = sand.u32 %s28, 1
        %s358 = scalar_lea.sflag [#allocation6], %s357
        %s359 = sand.u32 %s126, 1
        %s360 = smul.addr %s359, 256
        %s361 = scalar_lea.vmem [#allocation7], %s360
        %p362 = pneg %p139
        %p363 = pneg %p136
        %s364 = sand.u32 %s152, 1
        %s365 = scalar_lea.sflag [#allocation9], %s364
        %s366 = sand.u32 %s152, 1
        %s367 = smul.addr %s366, 32
        %s368 = scalar_lea.vmem [#allocation8], %s367
        %p369 = pneg %p165
        %p370 = pneg %p162
        %p371 = pneg %p191
        %p372 = pneg %p188
        %s373 = sand.u32 %s178, 1
        %s374 = scalar_lea.sflag [#allocation4], %s373
        %s375 = sand.u32 %s178, 1
        %s376 = smul.addr %s375, 8
        %s377 = scalar_lea.vmem [#allocation10], %s376
        %p378 = scmp.lt.s32.totalorder %s32, 1
        %s379 = scalar_select %p378, %s32, 1
        %s380 = scalar_lea.vmem %s1, %s379
        %p382 = scmp.eq.s32.totalorder %s33, 0
        // Predicated region
        $region57: #{tpu_custom_call.1} parent=39 // pred_check
          %p383 = pneg %p382
        $region58: #{tpu_custom_call.1} parent=39 // pred_check_branch
          %385 = sbr.rel (%p383) target = $region60
        $region59: #{tpu_custom_call.1} parent=39 // pred_region
          %v386 = vld [vmem:[%s306] sm:$0xff]
          %387 = vst [vmem:[%s377] sm:$0xff] %v386
        $region60: #{tpu_custom_call.1} parent=39 // pred_fallthru
          _
        %v388 = vld [vmem:[%s377] sm:$0xff]
        %v389 = vld [vmem:[%s380] sm:$0x1]
        %v390 = vld [vmem:[%s315] sm:$0xff]
        %v391 = vld [vmem:[%s315 + $0x8] sm:$0xff]
        %v392 = vld [vmem:[%s315 + $0x10] sm:$0xff]
        %v393 = vld [vmem:[%s315 + $0x18] sm:$0xff]
        %v394 = vld [vmem:[%s315 + $0x20] sm:$0xff]
        %v395 = vld [vmem:[%s315 + $0x28] sm:$0xff]
        %v396 = vld [vmem:[%s315 + $0x30] sm:$0xff]
        %v397 = vld [vmem:[%s315 + $0x38] sm:$0xff]
        %v398 = vld [vmem:[%s315 + $0x40] sm:$0xff]
        %v399 = vld [vmem:[%s315 + $0x48] sm:$0xff]
        %v400 = vld [vmem:[%s315 + $0x50] sm:$0xff]
        %v401 = vld [vmem:[%s315 + $0x58] sm:$0xff]
        %v402 = vld [vmem:[%s315 + $0x60] sm:$0xff]
        %v403 = vld [vmem:[%s315 + $0x68] sm:$0xff]
        %v404 = vld [vmem:[%s315 + $0x70] sm:$0xff]
        %v405 = vld [vmem:[%s315 + $0x78] sm:$0xff]
        %v406 = vld [vmem:[%s315 + $0x80] sm:$0xff]
        %v407 = vld [vmem:[%s315 + $0x88] sm:$0xff]
        %v408 = vld [vmem:[%s315 + $0x90] sm:$0xff]
        %v409 = vld [vmem:[%s315 + $0x98] sm:$0xff]
        %v410 = vld [vmem:[%s315 + $0xa0] sm:$0xff]
        %v411 = vld [vmem:[%s315 + $0xa8] sm:$0xff]
        %v412 = vld [vmem:[%s315 + $0xb0] sm:$0xff]
        %v413 = vld [vmem:[%s315 + $0xb8] sm:$0xff]
        %v414 = vld [vmem:[%s315 + $0xc0] sm:$0xff]
        %v415 = vld [vmem:[%s315 + $0xc8] sm:$0xff]
        %v416 = vld [vmem:[%s315 + $0xd0] sm:$0xff]
        %v417 = vld [vmem:[%s315 + $0xd8] sm:$0xff]
        %v418 = vld [vmem:[%s315 + $0xe0] sm:$0xff]
        %v419 = vld [vmem:[%s315 + $0xe8] sm:$0xff]
        %v420 = vld [vmem:[%s315 + $0xf0] sm:$0xff]
        %v421 = vld [vmem:[%s315 + $0xf8] sm:$0xff]
        %v422 = vld [vmem:[%s315 + $0x100] sm:$0xff]
        %v423 = vld [vmem:[%s315 + $0x108] sm:$0xff]
        %v424 = vld [vmem:[%s315 + $0x110] sm:$0xff]
        %v425 = vld [vmem:[%s315 + $0x118] sm:$0xff]
        %v426 = vld [vmem:[%s315 + $0x120] sm:$0xff]
        %v427 = vld [vmem:[%s315 + $0x128] sm:$0xff]
        %v428 = vld [vmem:[%s315 + $0x130] sm:$0xff]
        %v429 = vld [vmem:[%s315 + $0x138] sm:$0xff]
        %v430 = vld [vmem:[%s315 + $0x140] sm:$0xff]
        %v431 = vld [vmem:[%s315 + $0x148] sm:$0xff]
        %v432 = vld [vmem:[%s315 + $0x150] sm:$0xff]
        %v433 = vld [vmem:[%s315 + $0x158] sm:$0xff]
        %v434 = vld [vmem:[%s315 + $0x160] sm:$0xff]
        %v435 = vld [vmem:[%s315 + $0x168] sm:$0xff]
        %v436 = vld [vmem:[%s315 + $0x170] sm:$0xff]
        %v437 = vld [vmem:[%s315 + $0x178] sm:$0xff]
        %v438 = vld [vmem:[%s315 + $0x180] sm:$0xff]
        %v439 = vld [vmem:[%s315 + $0x188] sm:$0xff]
        %v440 = vld [vmem:[%s315 + $0x190] sm:$0xff]
        %v441 = vld [vmem:[%s315 + $0x198] sm:$0xff]
        %v442 = vld [vmem:[%s315 + $0x1a0] sm:$0xff]
        %v443 = vld [vmem:[%s315 + $0x1a8] sm:$0xff]
        %v444 = vld [vmem:[%s315 + $0x1b0] sm:$0xff]
        %v445 = vld [vmem:[%s315 + $0x1b8] sm:$0xff]
        %v446 = vld [vmem:[%s315 + $0x1c0] sm:$0xff]
        %v447 = vld [vmem:[%s315 + $0x1c8] sm:$0xff]
        %v448 = vld [vmem:[%s315 + $0x1d0] sm:$0xff]
        %v449 = vld [vmem:[%s315 + $0x1d8] sm:$0xff]
        %v450 = vld [vmem:[%s315 + $0x1e0] sm:$0xff]
        %v451 = vld [vmem:[%s315 + $0x1e8] sm:$0xff]
        %v452 = vld [vmem:[%s315 + $0x1f0] sm:$0xff]
        %v453 = vld [vmem:[%s315 + $0x1f8] sm:$0xff]
        %v454 = vld [vmem:[%s324] sm:$0xf]
        %v455 = vld [vmem:[%s324 + $0x4] sm:$0xf]
        %v456 = vld [vmem:[%s324 + $0x8] sm:$0xf]
        %v457 = vld [vmem:[%s324 + $0xc] sm:$0xf]
        %v458 = vld [vmem:[%s324 + $0x10] sm:$0xf]
        %v459 = vld [vmem:[%s324 + $0x14] sm:$0xf]
        %v460 = vld [vmem:[%s324 + $0x18] sm:$0xf]
        %v461 = vld [vmem:[%s324 + $0x1c] sm:$0xf]
        %v462 = vld [vmem:[%s324 + $0x20] sm:$0xf]
        %v463 = vld [vmem:[%s324 + $0x24] sm:$0xf]
        %v464 = vld [vmem:[%s324 + $0x28] sm:$0xf]
        %v465 = vld [vmem:[%s324 + $0x2c] sm:$0xf]
        %v466 = vld [vmem:[%s324 + $0x30] sm:$0xf]
        %v467 = vld [vmem:[%s324 + $0x34] sm:$0xf]
        %v468 = vld [vmem:[%s324 + $0x38] sm:$0xf]
        %v469 = vld [vmem:[%s324 + $0x3c] sm:$0xf]
        %v470 = vld [vmem:[%s324 + $0x40] sm:$0xf]
        %v471 = vld [vmem:[%s324 + $0x44] sm:$0xf]
        %v472 = vld [vmem:[%s324 + $0x48] sm:$0xf]
        %v473 = vld [vmem:[%s324 + $0x4c] sm:$0xf]
        %v474 = vld [vmem:[%s324 + $0x50] sm:$0xf]
        %v475 = vld [vmem:[%s324 + $0x54] sm:$0xf]
        %v476 = vld [vmem:[%s324 + $0x58] sm:$0xf]
        %v477 = vld [vmem:[%s324 + $0x5c] sm:$0xf]
        %v478 = vld [vmem:[%s324 + $0x60] sm:$0xf]
        %v479 = vld [vmem:[%s324 + $0x64] sm:$0xf]
        %v480 = vld [vmem:[%s324 + $0x68] sm:$0xf]
        %v481 = vld [vmem:[%s324 + $0x6c] sm:$0xf]
        %v482 = vld [vmem:[%s324 + $0x70] sm:$0xf]
        %v483 = vld [vmem:[%s324 + $0x74] sm:$0xf]
        %v484 = vld [vmem:[%s324 + $0x78] sm:$0xf]
        %v485 = vld [vmem:[%s324 + $0x7c] sm:$0xf]
        %v486 = vld [vmem:[%s324 + $0x80] sm:$0xf]
        %v487 = vld [vmem:[%s324 + $0x84] sm:$0xf]
        %v488 = vld [vmem:[%s324 + $0x88] sm:$0xf]
        %v489 = vld [vmem:[%s324 + $0x8c] sm:$0xf]
        %v490 = vld [vmem:[%s324 + $0x90] sm:$0xf]
        %v491 = vld [vmem:[%s324 + $0x94] sm:$0xf]
        %v492 = vld [vmem:[%s324 + $0x98] sm:$0xf]
        %v493 = vld [vmem:[%s324 + $0x9c] sm:$0xf]
        %v494 = vld [vmem:[%s324 + $0xa0] sm:$0xf]
        %v495 = vld [vmem:[%s324 + $0xa4] sm:$0xf]
        %v496 = vld [vmem:[%s324 + $0xa8] sm:$0xf]
        %v497 = vld [vmem:[%s324 + $0xac] sm:$0xf]
        %v498 = vld [vmem:[%s324 + $0xb0] sm:$0xf]
        %v499 = vld [vmem:[%s324 + $0xb4] sm:$0xf]
        %v500 = vld [vmem:[%s324 + $0xb8] sm:$0xf]
        %v501 = vld [vmem:[%s324 + $0xbc] sm:$0xf]
        %v502 = vld [vmem:[%s324 + $0xc0] sm:$0xf]
        %v503 = vld [vmem:[%s324 + $0xc4] sm:$0xf]
        %v504 = vld [vmem:[%s324 + $0xc8] sm:$0xf]
        %v505 = vld [vmem:[%s324 + $0xcc] sm:$0xf]
        %v506 = vld [vmem:[%s324 + $0xd0] sm:$0xf]
        %v507 = vld [vmem:[%s324 + $0xd4] sm:$0xf]
        %v508 = vld [vmem:[%s324 + $0xd8] sm:$0xf]
        %v509 = vld [vmem:[%s324 + $0xdc] sm:$0xf]
        %v510 = vld [vmem:[%s324 + $0xe0] sm:$0xf]
        %v511 = vld [vmem:[%s324 + $0xe4] sm:$0xf]
        %v512 = vld [vmem:[%s324 + $0xe8] sm:$0xf]
        %v513 = vld [vmem:[%s324 + $0xec] sm:$0xf]
        %v514 = vld [vmem:[%s324 + $0xf0] sm:$0xf]
        %v515 = vld [vmem:[%s324 + $0xf4] sm:$0xf]
        %v516 = vld [vmem:[%s324 + $0xf8] sm:$0xf]
        %v517 = vld [vmem:[%s324 + $0xfc] sm:$0xf]
        %v518 = vld [vmem:[%s333] sm:$0xff]
        %v519 = vld [vmem:[%s333 + $0x8] sm:$0xff]
        %v520 = vld [vmem:[%s333 + $0x10] sm:$0xff]
        %v521 = vld [vmem:[%s333 + $0x18] sm:$0xff]
        %v522 = vpack.c.bf16 %v388, %v388
        %v523 = vlaneseq
        %v524 = vshrl.u32 %v523, 7
        %v525 = vsub.s32 0, %v524
        %v526 = vrot.slane %v518, %v525
        %v527 = vlaneseq
        %v528 = vshrl.u32 %v527, 7
        %v529 = vsub.s32 0, %v528
        %v530 = vrot.slane %v519, %v529
        %v531 = vlaneseq
        %v532 = vshrl.u32 %v531, 7
        %v533 = vsub.s32 0, %v532
        %v534 = vrot.slane %v520, %v533
        %v567 = vunpack.c.l.b16 %v390
        %v568 = vunpack.c.h.b16 %v390
        %v569 = vunpack.c.l.b16 %v391
        %v570 = vunpack.c.l.b16 %v394
        %v571 = vunpack.c.h.b16 %v394
        %v572 = vunpack.c.l.b16 %v395
        %v573 = vunpack.c.l.b16 %v398
        %v574 = vunpack.c.h.b16 %v398
        %v575 = vunpack.c.l.b16 %v399
        %v576 = vunpack.c.l.b16 %v402
        %v577 = vunpack.c.h.b16 %v402
        %v578 = vunpack.c.l.b16 %v403
        %v579 = vunpack.c.l.b16 %v406
        %v580 = vunpack.c.h.b16 %v406
        %v581 = vunpack.c.l.b16 %v407
        %v582 = vunpack.c.l.b16 %v410
        %v583 = vunpack.c.h.b16 %v410
        %v584 = vunpack.c.l.b16 %v411
        %v585 = vunpack.c.l.b16 %v414
        %v586 = vunpack.c.h.b16 %v414
        %v587 = vunpack.c.l.b16 %v415
        %v588 = vunpack.c.l.b16 %v418
        %v589 = vunpack.c.h.b16 %v418
        %v590 = vunpack.c.l.b16 %v419
        %v591 = vunpack.c.l.b16 %v422
        %v592 = vunpack.c.h.b16 %v422
        %v593 = vunpack.c.l.b16 %v423
        %v594 = vunpack.c.l.b16 %v426
        %v595 = vunpack.c.h.b16 %v426
        %v596 = vunpack.c.l.b16 %v427
        %v597 = vunpack.c.l.b16 %v430
        %v598 = vunpack.c.h.b16 %v430
        %v599 = vunpack.c.l.b16 %v431
        %v600 = vunpack.c.l.b16 %v434
        %v601 = vunpack.c.h.b16 %v434
        %v602 = vunpack.c.l.b16 %v435
        %v603 = vunpack.c.l.b16 %v438
        %v604 = vunpack.c.h.b16 %v438
        %v605 = vunpack.c.l.b16 %v439
        %v606 = vunpack.c.l.b16 %v442
        %v607 = vunpack.c.h.b16 %v442
        %v608 = vunpack.c.l.b16 %v443
        %v609 = vunpack.c.l.b16 %v446
        %v610 = vunpack.c.h.b16 %v446
        %v611 = vunpack.c.l.b16 %v447
        %v612 = vunpack.c.l.b16 %v450
        %v613 = vunpack.c.h.b16 %v450
        %v614 = vunpack.c.l.b16 %v451
        %v615 = vpack.c.b16 %v570, %v567
        %v616 = vpack.c.b16 %v571, %v568
        %v617 = vpack.c.b16 %v572, %v569
        %v618 = vpack.c.b16 %v576, %v573
        %v619 = vpack.c.b16 %v577, %v574
        %v620 = vpack.c.b16 %v578, %v575
        %v621 = vpack.c.b16 %v582, %v579
        %v622 = vpack.c.b16 %v583, %v580
        %v623 = vpack.c.b16 %v584, %v581
        %v624 = vpack.c.b16 %v588, %v585
        %v625 = vpack.c.b16 %v589, %v586
        %v626 = vpack.c.b16 %v590, %v587
        %v627 = vpack.c.b16 %v594, %v591
        %v628 = vpack.c.b16 %v595, %v592
        %v629 = vpack.c.b16 %v596, %v593
        %v630 = vpack.c.b16 %v600, %v597
        %v631 = vpack.c.b16 %v601, %v598
        %v632 = vpack.c.b16 %v602, %v599
        %v633 = vpack.c.b16 %v606, %v603
        %v634 = vpack.c.b16 %v607, %v604
        %v635 = vpack.c.b16 %v608, %v605
        %v636 = vpack.c.b16 %v612, %v609
        %v637 = vpack.c.b16 %v613, %v610
        %v638 = vpack.c.b16 %v614, %v611
        %663 = vmatprep.subr.bf16.mxu0 %v616
        %664 = vmatpush1.bf16.msra.mxu0 %v615
        %665 = vmatprep.subr.bf16.mxu0 %v619
        %666 = vmatpush1.bf16.msra.mxu0 %v618
        %667 = vmatprep.subr.bf16.mxu0 %v622
        %668 = vmatpush1.bf16.msra.mxu0 %v621
        %669 = vmatprep.subr.bf16.mxu0 %v625
        %670 = vmatpush1.bf16.msra.mxu0 %v624
        %671 = vmatprep.subr.bf16.mxu0 %v628
        %672 = vmatpush1.bf16.msra.mxu0 %v627
        %673 = vmatprep.subr.bf16.mxu0 %v631
        %674 = vmatpush1.bf16.msra.mxu0 %v630
        %675 = vmatprep.subr.bf16.mxu0 %v634
        %676 = vmatpush1.bf16.msra.mxu0 %v633
        %677 = vmatprep.subr.bf16.mxu0 %v637
        %678 = vmatpush1.bf16.msra.mxu0 %v636
        %679 = vmatprep.subr.bf16.mxu0 0
        %680 = vmatpush1.bf16.msra.mxu0 0
        %681 = vmatprep.subr.bf16.mxu0 0
        %682 = vmatpush1.bf16.msra.mxu0 0
        %683 = vmatprep.subr.bf16.mxu0 0
        %684 = vmatpush1.bf16.msra.mxu0 0
        %685 = vmatprep.subr.bf16.mxu0 0
        %686 = vmatpush1.bf16.msra.mxu0 0
        %687 = vmatprep.subr.bf16.mxu0 0
        %688 = vmatpush1.bf16.msra.mxu0 0
        %689 = vmatprep.subr.bf16.mxu0 0
        %690 = vmatpush1.bf16.msra.mxu0 0
        %691 = vmatprep.subr.bf16.mxu0 0
        %692 = vmatpush1.bf16.msra.mxu0 0
        %693 = vmatprep.subr.bf16.mxu0 0
        %694 = vmatpush1.bf16.msra.mxu0 0
        %695 = vmatprep.mubr.bf16.mxu0 0
        %696 = vmatmul.mubr.bf16.gmra.mrb[0].mxu0 %v522
        %v697 = vpop.f32.mrb[0].mxu0
        %v698 = vadd.f32 %v526, %v697
        %v699 = vpop.f32.mrb[0].mxu0
        %v700 = vadd.f32 %v530, %v699
        %v701 = vpop.f32.mrb[0].mxu0
        %v702 = vpop.f32.mrb[0].mxu0
        %703 = vdwg.mxu0
        %704 = vmatprep.subr.bf16.mxu0 0
        %705 = vmatpush1.bf16.msra.mxu0 %v617
        %706 = vmatprep.subr.bf16.mxu0 0
        %707 = vmatpush1.bf16.msra.mxu0 %v620
        %708 = vmatprep.subr.bf16.mxu0 0
        %709 = vmatpush1.bf16.msra.mxu0 %v623
        %710 = vmatprep.subr.bf16.mxu0 0
        %711 = vmatpush1.bf16.msra.mxu0 %v626
        %712 = vmatprep.subr.bf16.mxu0 0
        %713 = vmatpush1.bf16.msra.mxu0 %v629
        %714 = vmatprep.subr.bf16.mxu0 0
        %715 = vmatpush1.bf16.msra.mxu0 %v632
        %716 = vmatprep.subr.bf16.mxu0 0
        %717 = vmatpush1.bf16.msra.mxu0 %v635
        %718 = vmatprep.subr.bf16.mxu0 0
        %719 = vmatpush1.bf16.msra.mxu0 %v638
        %720 = vmatprep.subr.bf16.mxu0 0
        %721 = vmatpush1.bf16.msra.mxu0 0
        %722 = vmatprep.subr.bf16.mxu0 0
        %723 = vmatpush1.bf16.msra.mxu0 0
        %724 = vmatprep.subr.bf16.mxu0 0
        %725 = vmatpush1.bf16.msra.mxu0 0
        %726 = vmatprep.subr.bf16.mxu0 0
        %727 = vmatpush1.bf16.msra.mxu0 0
        %728 = vmatprep.subr.bf16.mxu0 0
        %729 = vmatpush1.bf16.msra.mxu0 0
        %730 = vmatprep.subr.bf16.mxu0 0
        %731 = vmatpush1.bf16.msra.mxu0 0
        %732 = vmatprep.subr.bf16.mxu0 0
        %733 = vmatpush1.bf16.msra.mxu0 0
        %734 = vmatprep.subr.bf16.mxu0 0
        %735 = vmatpush1.bf16.msra.mxu0 0
        %736 = vmatprep.mubr.bf16.mxu0 0
        %737 = vmatmul.mubr.bf16.gmra.mrb[0].mxu0 %v522
        %v738 = vpop.f32.mrb[0].mxu0
        %v739 = vadd.f32 %v534, %v738
        %v740 = vpop.f32.mrb[0].mxu0
        %v741 = vpop.f32.mrb[0].mxu0
        %v742 = vpop.f32.mrb[0].mxu0
        %743 = vdwg.mxu0
        %745 = vrot.lane.b32.xlu0 %v698, 96
        %v746 = vpop.permute.xlu0 %745
        %748 = vrot.lane.b32.xlu0 %v698, 64
        %v749 = vpop.permute.xlu0 %748
        %751 = vrot.lane.b32.xlu0 %v698, 32
        %v752 = vpop.permute.xlu0 %751
        %v754 = vcombine.low %v698, %v749
        %v755 = vcombine.high %v698, %v749
        %v757 = vunpack.c.l.s4 1983009808
        %v758 = vunpack.c.0.s8 %v757
        %v759 = vlaneseq
        %v760 = vshrl.u32 %v759, 7
        %v761 = vsub.s32 %v758, %v760
        %v762 = vrot.slane %v754, %v761
        %v764 = vunpack.c.l.s4 1983009808
        %v765 = vunpack.c.0.s8 %v764
        %v766 = vlaneseq
        %v767 = vshrl.u32 %v766, 7
        %v768 = vsub.s32 %v765, %v767
        %v769 = vrot.slane %v755, %v768
        %v770 = vcombine.low %v746, %v752
        %v771 = vcombine.high %v746, %v752
        %v773 = vunpack.c.l.s4 1983009808
        %v774 = vunpack.c.0.s8 %v773
        %v775 = vlaneseq
        %v776 = vshrl.u32 %v775, 7
        %v777 = vsub.s32 %v774, %v776
        %v778 = vrot.slane %v770, %v777
        %v780 = vunpack.c.l.s4 1983009808
        %v781 = vunpack.c.0.s8 %v780
        %v782 = vlaneseq
        %v783 = vshrl.u32 %v782, 7
        %v784 = vsub.s32 %v781, %v783
        %v785 = vrot.slane %v771, %v784
        %v786 = vcombine.low %v762, %v778
        %v787 = vcombine.high %v762, %v778
        %v789 = vunpack.c.l.s4 1934713408
        %v790 = vunpack.c.0.s8 %v789
        %v791 = vlaneseq
        %v792 = vshrl.u32 %v791, 7
        %v793 = vsub.s32 %v790, %v792
        %v794 = vrot.slane %v786, %v793
        %v796 = vunpack.c.l.s4 1934713408
        %v797 = vunpack.c.0.s8 %v796
        %v798 = vlaneseq
        %v799 = vshrl.u32 %v798, 7
        %v800 = vsub.s32 %v797, %v799
        %v801 = vrot.slane %v787, %v800
        %v802 = vcombine.low %v769, %v785
        %v803 = vcombine.high %v769, %v785
        %v805 = vunpack.c.l.s4 1934713408
        %v806 = vunpack.c.0.s8 %v805
        %v807 = vlaneseq
        %v808 = vshrl.u32 %v807, 7
        %v809 = vsub.s32 %v806, %v808
        %v810 = vrot.slane %v802, %v809
        %v812 = vunpack.c.l.s4 1934713408
        %v813 = vunpack.c.0.s8 %v812
        %v814 = vlaneseq
        %v815 = vshrl.u32 %v814, 7
        %v816 = vsub.s32 %v813, %v815
        %v817 = vrot.slane %v803, %v816
        %v818 = vcombine.high %v794, 0.0
        %v819 = vcombine.high %v801, 0.0
        %v820 = vcombine.high %v810, 0.0
        %v821 = vcombine.high %v817, 0.0
        %v822 = vcombine.low %v794, %v801
        %v824 = vunpack.c.l.s4 1983009808
        %v825 = vunpack.c.0.s8 %v824
        %v826 = vlaneseq
        %v827 = vshrl.u32 %v826, 7
        %v828 = vsub.s32 %v825, %v827
        %v829 = vrot.slane %v822, %v828
        %v830 = vcombine.low %v818, %v819
        %v832 = vunpack.c.l.s4 1983009808
        %v833 = vunpack.c.0.s8 %v832
        %v834 = vlaneseq
        %v835 = vshrl.u32 %v834, 7
        %v836 = vsub.s32 %v833, %v835
        %v837 = vrot.slane %v830, %v836
        %v838 = vcombine.low %v810, %v817
        %v840 = vunpack.c.l.s4 1983009808
        %v841 = vunpack.c.0.s8 %v840
        %v842 = vlaneseq
        %v843 = vshrl.u32 %v842, 7
        %v844 = vsub.s32 %v841, %v843
        %v845 = vrot.slane %v838, %v844
        %v846 = vcombine.low %v820, %v821
        %v848 = vunpack.c.l.s4 1983009808
        %v849 = vunpack.c.0.s8 %v848
        %v850 = vlaneseq
        %v851 = vshrl.u32 %v850, 7
        %v852 = vsub.s32 %v849, %v851
        %v853 = vrot.slane %v846, %v852
        %v854 = vcombine.low %v829, %v837
        %v855 = vcombine.high %v829, %v837
        %v857 = vunpack.c.l.s4 1934713408
        %v858 = vunpack.c.0.s8 %v857
        %v859 = vlaneseq
        %v860 = vshrl.u32 %v859, 7
        %v861 = vsub.s32 %v858, %v860
        %v862 = vrot.slane %v854, %v861
        %v864 = vunpack.c.l.s4 1934713408
        %v865 = vunpack.c.0.s8 %v864
        %v866 = vlaneseq
        %v867 = vshrl.u32 %v866, 7
        %v868 = vsub.s32 %v865, %v867
        %v869 = vrot.slane %v855, %v868
        %v870 = vcombine.low %v845, %v853
        %v871 = vcombine.high %v845, %v853
        %v873 = vunpack.c.l.s4 1934713408
        %v874 = vunpack.c.0.s8 %v873
        %v875 = vlaneseq
        %v876 = vshrl.u32 %v875, 7
        %v877 = vsub.s32 %v874, %v876
        %v878 = vrot.slane %v870, %v877
        %v880 = vunpack.c.l.s4 1934713408
        %v881 = vunpack.c.0.s8 %v880
        %v882 = vlaneseq
        %v883 = vshrl.u32 %v882, 7
        %v884 = vsub.s32 %v881, %v883
        %v885 = vrot.slane %v871, %v884
        %v886 = vcombine.low %v862, %v878
        %v887 = vcombine.high %v862, %v878
        %v888 = vcombine.low %v869, %v885
        %v889 = vcombine.high %v869, %v885
        %v890 = vpack.c.bf16 %v886, %v886
        %v891 = vpack.c.bf16 %v887, %v887
        %v892 = vpack.c.bf16 %v888, %v888
        %v893 = vpack.c.bf16 %v889, %v889
        %895 = vrot.lane.b32.xlu0 %v700, 96
        %v896 = vpop.permute.xlu0 %895
        %898 = vrot.lane.b32.xlu0 %v700, 64
        %v899 = vpop.permute.xlu0 %898
        %901 = vrot.lane.b32.xlu0 %v700, 32
        %v902 = vpop.permute.xlu0 %901
        %v904 = vcombine.low %v700, %v899
        %v905 = vcombine.high %v700, %v899
        %v907 = vunpack.c.l.s4 1983009808
        %v908 = vunpack.c.0.s8 %v907
        %v909 = vlaneseq
        %v910 = vshrl.u32 %v909, 7
        %v911 = vsub.s32 %v908, %v910
        %v912 = vrot.slane %v904, %v911
        %v914 = vunpack.c.l.s4 1983009808
        %v915 = vunpack.c.0.s8 %v914
        %v916 = vlaneseq
        %v917 = vshrl.u32 %v916, 7
        %v918 = vsub.s32 %v915, %v917
        %v919 = vrot.slane %v905, %v918
        %v920 = vcombine.low %v896, %v902
        %v921 = vcombine.high %v896, %v902
        %v923 = vunpack.c.l.s4 1983009808
        %v924 = vunpack.c.0.s8 %v923
        %v925 = vlaneseq
        %v926 = vshrl.u32 %v925, 7
        %v927 = vsub.s32 %v924, %v926
        %v928 = vrot.slane %v920, %v927
        %v930 = vunpack.c.l.s4 1983009808
        %v931 = vunpack.c.0.s8 %v930
        %v932 = vlaneseq
        %v933 = vshrl.u32 %v932, 7
        %v934 = vsub.s32 %v931, %v933
        %v935 = vrot.slane %v921, %v934
        %v936 = vcombine.low %v912, %v928
        %v937 = vcombine.high %v912, %v928
        %v939 = vunpack.c.l.s4 1934713408
        %v940 = vunpack.c.0.s8 %v939
        %v941 = vlaneseq
        %v942 = vshrl.u32 %v941, 7
        %v943 = vsub.s32 %v940, %v942
        %v944 = vrot.slane %v936, %v943
        %v946 = vunpack.c.l.s4 1934713408
        %v947 = vunpack.c.0.s8 %v946
        %v948 = vlaneseq
        %v949 = vshrl.u32 %v948, 7
        %v950 = vsub.s32 %v947, %v949
        %v951 = vrot.slane %v937, %v950
        %v952 = vcombine.low %v919, %v935
        %v953 = vcombine.high %v919, %v935
        %v955 = vunpack.c.l.s4 1934713408
        %v956 = vunpack.c.0.s8 %v955
        %v957 = vlaneseq
        %v958 = vshrl.u32 %v957, 7
        %v959 = vsub.s32 %v956, %v958
        %v960 = vrot.slane %v952, %v959
        %v962 = vunpack.c.l.s4 1934713408
        %v963 = vunpack.c.0.s8 %v962
        %v964 = vlaneseq
        %v965 = vshrl.u32 %v964, 7
        %v966 = vsub.s32 %v963, %v965
        %v967 = vrot.slane %v953, %v966
        %v968 = vcombine.high %v944, 0.0
        %v969 = vcombine.high %v951, 0.0
        %v970 = vcombine.high %v960, 0.0
        %v971 = vcombine.high %v967, 0.0
        %v972 = vcombine.low %v944, %v951
        %v974 = vunpack.c.l.s4 1983009808
        %v975 = vunpack.c.0.s8 %v974
        %v976 = vlaneseq
        %v977 = vshrl.u32 %v976, 7
        %v978 = vsub.s32 %v975, %v977
        %v979 = vrot.slane %v972, %v978
        %v980 = vcombine.low %v968, %v969
        %v982 = vunpack.c.l.s4 1983009808
        %v983 = vunpack.c.0.s8 %v982
        %v984 = vlaneseq
        %v985 = vshrl.u32 %v984, 7
        %v986 = vsub.s32 %v983, %v985
        %v987 = vrot.slane %v980, %v986
        %v988 = vcombine.low %v960, %v967
        %v990 = vunpack.c.l.s4 1983009808
        %v991 = vunpack.c.0.s8 %v990
        %v992 = vlaneseq
        %v993 = vshrl.u32 %v992, 7
        %v994 = vsub.s32 %v991, %v993
        %v995 = vrot.slane %v988, %v994
        %v996 = vcombine.low %v970, %v971
        %v998 = vunpack.c.l.s4 1983009808
        %v999 = vunpack.c.0.s8 %v998
        %v1000 = vlaneseq
        %v1001 = vshrl.u32 %v1000, 7
        %v1002 = vsub.s32 %v999, %v1001
        %v1003 = vrot.slane %v996, %v1002
        %v1004 = vcombine.low %v979, %v987
        %v1005 = vcombine.high %v979, %v987
        %v1007 = vunpack.c.l.s4 1934713408
        %v1008 = vunpack.c.0.s8 %v1007
        %v1009 = vlaneseq
        %v1010 = vshrl.u32 %v1009, 7
        %v1011 = vsub.s32 %v1008, %v1010
        %v1012 = vrot.slane %v1004, %v1011
        %v1014 = vunpack.c.l.s4 1934713408
        %v1015 = vunpack.c.0.s8 %v1014
        %v1016 = vlaneseq
        %v1017 = vshrl.u32 %v1016, 7
        %v1018 = vsub.s32 %v1015, %v1017
        %v1019 = vrot.slane %v1005, %v1018
        %v1020 = vcombine.low %v995, %v1003
        %v1021 = vcombine.high %v995, %v1003
        %v1023 = vunpack.c.l.s4 1934713408
        %v1024 = vunpack.c.0.s8 %v1023
        %v1025 = vlaneseq
        %v1026 = vshrl.u32 %v1025, 7
        %v1027 = vsub.s32 %v1024, %v1026
        %v1028 = vrot.slane %v1020, %v1027
        %v1030 = vunpack.c.l.s4 1934713408
        %v1031 = vunpack.c.0.s8 %v1030
        %v1032 = vlaneseq
        %v1033 = vshrl.u32 %v1032, 7
        %v1034 = vsub.s32 %v1031, %v1033
        %v1035 = vrot.slane %v1021, %v1034
        %v1036 = vcombine.low %v1012, %v1028
        %v1037 = vcombine.high %v1012, %v1028
        %v1038 = vcombine.low %v1019, %v1035
        %v1039 = vcombine.high %v1019, %v1035
        %v1040 = vpack.c.bf16 %v1036, %v1036
        %v1041 = vpack.c.bf16 %v1037, %v1037
        %v1042 = vpack.c.bf16 %v1038, %v1038
        %v1043 = vpack.c.bf16 %v1039, %v1039
        %1045 = vrot.lane.b32.xlu0 %v739, 96
        %v1046 = vpop.permute.xlu0 %1045
        %1048 = vrot.lane.b32.xlu0 %v739, 64
        %v1049 = vpop.permute.xlu0 %1048
        %1051 = vrot.lane.b32.xlu0 %v739, 32
        %v1052 = vpop.permute.xlu0 %1051
        %v1054 = vcombine.low %v739, %v1049
        %v1055 = vcombine.high %v739, %v1049
        %v1057 = vunpack.c.l.s4 1983009808
        %v1058 = vunpack.c.0.s8 %v1057
        %v1059 = vlaneseq
        %v1060 = vshrl.u32 %v1059, 7
        %v1061 = vsub.s32 %v1058, %v1060
        %v1062 = vrot.slane %v1054, %v1061
        %v1064 = vunpack.c.l.s4 1983009808
        %v1065 = vunpack.c.0.s8 %v1064
        %v1066 = vlaneseq
        %v1067 = vshrl.u32 %v1066, 7
        %v1068 = vsub.s32 %v1065, %v1067
        %v1069 = vrot.slane %v1055, %v1068
        %v1070 = vcombine.low %v1046, %v1052
        %v1071 = vcombine.high %v1046, %v1052
        %v1073 = vunpack.c.l.s4 1983009808
        %v1074 = vunpack.c.0.s8 %v1073
        %v1075 = vlaneseq
        %v1076 = vshrl.u32 %v1075, 7
        %v1077 = vsub.s32 %v1074, %v1076
        %v1078 = vrot.slane %v1070, %v1077
        %v1080 = vunpack.c.l.s4 1983009808
        %v1081 = vunpack.c.0.s8 %v1080
        %v1082 = vlaneseq
        %v1083 = vshrl.u32 %v1082, 7
        %v1084 = vsub.s32 %v1081, %v1083
        %v1085 = vrot.slane %v1071, %v1084
        %v1086 = vcombine.low %v1062, %v1078
        %v1087 = vcombine.high %v1062, %v1078
        %v1089 = vunpack.c.l.s4 1934713408
        %v1090 = vunpack.c.0.s8 %v1089
        %v1091 = vlaneseq
        %v1092 = vshrl.u32 %v1091, 7
        %v1093 = vsub.s32 %v1090, %v1092
        %v1094 = vrot.slane %v1086, %v1093
        %v1096 = vunpack.c.l.s4 1934713408
        %v1097 = vunpack.c.0.s8 %v1096
        %v1098 = vlaneseq
        %v1099 = vshrl.u32 %v1098, 7
        %v1100 = vsub.s32 %v1097, %v1099
        %v1101 = vrot.slane %v1087, %v1100
        %v1102 = vcombine.low %v1069, %v1085
        %v1103 = vcombine.high %v1069, %v1085
        %v1105 = vunpack.c.l.s4 1934713408
        %v1106 = vunpack.c.0.s8 %v1105
        %v1107 = vlaneseq
        %v1108 = vshrl.u32 %v1107, 7
        %v1109 = vsub.s32 %v1106, %v1108
        %v1110 = vrot.slane %v1102, %v1109
        %v1112 = vunpack.c.l.s4 1934713408
        %v1113 = vunpack.c.0.s8 %v1112
        %v1114 = vlaneseq
        %v1115 = vshrl.u32 %v1114, 7
        %v1116 = vsub.s32 %v1113, %v1115
        %v1117 = vrot.slane %v1103, %v1116
        %v1118 = vcombine.high %v1094, 0.0
        %v1119 = vcombine.high %v1101, 0.0
        %v1120 = vcombine.high %v1110, 0.0
        %v1121 = vcombine.high %v1117, 0.0
        %v1122 = vcombine.low %v1094, %v1101
        %v1124 = vunpack.c.l.s4 1983009808
        %v1125 = vunpack.c.0.s8 %v1124
        %v1126 = vlaneseq
        %v1127 = vshrl.u32 %v1126, 7
        %v1128 = vsub.s32 %v1125, %v1127
        %v1129 = vrot.slane %v1122, %v1128
        %v1130 = vcombine.low %v1118, %v1119
        %v1132 = vunpack.c.l.s4 1983009808
        %v1133 = vunpack.c.0.s8 %v1132
        %v1134 = vlaneseq
        %v1135 = vshrl.u32 %v1134, 7
        %v1136 = vsub.s32 %v1133, %v1135
        %v1137 = vrot.slane %v1130, %v1136
        %v1138 = vcombine.low %v1110, %v1117
        %v1140 = vunpack.c.l.s4 1983009808
        %v1141 = vunpack.c.0.s8 %v1140
        %v1142 = vlaneseq
        %v1143 = vshrl.u32 %v1142, 7
        %v1144 = vsub.s32 %v1141, %v1143
        %v1145 = vrot.slane %v1138, %v1144
        %v1146 = vcombine.low %v1120, %v1121
        %v1148 = vunpack.c.l.s4 1983009808
        %v1149 = vunpack.c.0.s8 %v1148
        %v1150 = vlaneseq
        %v1151 = vshrl.u32 %v1150, 7
        %v1152 = vsub.s32 %v1149, %v1151
        %v1153 = vrot.slane %v1146, %v1152
        %v1154 = vcombine.low %v1129, %v1137
        %v1155 = vcombine.high %v1129, %v1137
        %v1157 = vunpack.c.l.s4 1934713408
        %v1158 = vunpack.c.0.s8 %v1157
        %v1159 = vlaneseq
        %v1160 = vshrl.u32 %v1159, 7
        %v1161 = vsub.s32 %v1158, %v1160
        %v1162 = vrot.slane %v1154, %v1161
        %v1164 = vunpack.c.l.s4 1934713408
        %v1165 = vunpack.c.0.s8 %v1164
        %v1166 = vlaneseq
        %v1167 = vshrl.u32 %v1166, 7
        %v1168 = vsub.s32 %v1165, %v1167
        %v1169 = vrot.slane %v1155, %v1168
        %v1170 = vcombine.low %v1145, %v1153
        %v1171 = vcombine.high %v1145, %v1153
        %v1173 = vunpack.c.l.s4 1934713408
        %v1174 = vunpack.c.0.s8 %v1173
        %v1175 = vlaneseq
        %v1176 = vshrl.u32 %v1175, 7
        %v1177 = vsub.s32 %v1174, %v1176
        %v1178 = vrot.slane %v1170, %v1177
        %v1180 = vunpack.c.l.s4 1934713408
        %v1181 = vunpack.c.0.s8 %v1180
        %v1182 = vlaneseq
        %v1183 = vshrl.u32 %v1182, 7
        %v1184 = vsub.s32 %v1181, %v1183
        %v1185 = vrot.slane %v1171, %v1184
        %v1186 = vcombine.low %v1162, %v1178
        %v1187 = vcombine.high %v1162, %v1178
        %v1188 = vcombine.low %v1169, %v1185
        %v1189 = vcombine.high %v1169, %v1185
        %v1190 = vpack.c.bf16 %v1186, %v1186
        %v1191 = vpack.c.bf16 %v1187, %v1187
        %v1192 = vpack.c.bf16 %v1188, %v1188
        %v1193 = vpack.c.bf16 %v1189, %v1189
        %v1195 = vlaneseq
        %v1196 = vshrl.u32 %v1195, 7
        %v1197 = vsub.s32 0, %v1196
        %v1198 = vrot.slane %v389, %v1197
        %vm1200 = vcmask 261120
        %v1202 = vsel %vm1200, %v890, 0
        %v1205 = vsel %vm1200, %v1040, 0
        %1207 = vmatprep.subr.bf16.mxu0 0
        %1208 = vmatpush1.bf16.xpose.msra.mxu0 %v1205
        %1209 = vmatprep.subr.bf16.mxu0 0
        %1210 = vmatpush1.bf16.xpose.msra.mxu0 0
        %1211 = vmatprep.subr.bf16.mxu0 0
        %1212 = vmatpush1.bf16.xpose.msra.mxu0 0
        %1213 = vmatprep.subr.bf16.mxu0 0
        %1214 = vmatpush1.bf16.xpose.msra.mxu0 0
        %1215 = vmatprep.subr.bf16.mxu0 0
        %1216 = vmatpush1.bf16.xpose.msra.mxu0 0
        %1217 = vmatprep.subr.bf16.mxu0 0
        %1218 = vmatpush1.bf16.xpose.msra.mxu0 0
        %1219 = vmatprep.subr.bf16.mxu0 0
        %1220 = vmatpush1.bf16.xpose.msra.mxu0 0
        %1221 = vmatprep.subr.bf16.mxu0 0
        %1222 = vmatpush1.bf16.xpose.msra.mxu0 0
        %1223 = vmatprep.subr.bf16.mxu0 0
        %1224 = vmatpush1.bf16.xpose.msra.mxu0 0
        %1225 = vmatprep.subr.bf16.mxu0 0
        %1226 = vmatpush1.bf16.xpose.msra.mxu0 0
        %1227 = vmatprep.subr.bf16.mxu0 0
        %1228 = vmatpush1.bf16.xpose.msra.mxu0 0
        %1229 = vmatprep.subr.bf16.mxu0 0
        %1230 = vmatpush1.bf16.xpose.msra.mxu0 0
        %1231 = vmatprep.subr.bf16.mxu0 0
        %1232 = vmatpush1.bf16.xpose.msra.mxu0 0
        %1233 = vmatprep.subr.bf16.mxu0 0
        %1234 = vmatpush1.bf16.xpose.msra.mxu0 0
        %1235 = vmatprep.subr.bf16.mxu0 0
        %1236 = vmatpush1.bf16.xpose.msra.mxu0 0
        %1237 = vmatprep.subr.bf16.mxu0 0
        %1238 = vmatpush1.bf16.xpose.msra.mxu0 0
        %1239 = vmatprep.mubr.bf16.mxu0 0
        %1240 = vmatmul.mubr.bf16.gmra.mrb[0].mxu0 %v1202
        %v1241 = vpop.f32.mrb[0].mxu0
        %v1242 = vadd.f32 %v1198, %v1241
        %v1243 = vpop.f32.mrb[0].mxu0
        %v1244 = vpop.f32.mrb[0].mxu0
        %v1245 = vpop.f32.mrb[0].mxu0
        %1246 = vdwg.mxu0
        %v1248 = vsel %vm1200, %v891, 0
        %v1251 = vsel %vm1200, %v1041, 0
        %1253 = vmatprep.subr.bf16.mxu0 0
        %1254 = vmatpush1.bf16.xpose.msra.mxu0 %v1251
        %1255 = vmatprep.subr.bf16.mxu0 0
        %1256 = vmatpush1.bf16.xpose.msra.mxu0 0
        %1257 = vmatprep.subr.bf16.mxu0 0
        %1258 = vmatpush1.bf16.xpose.msra.mxu0 0
        %1259 = vmatprep.subr.bf16.mxu0 0
        %1260 = vmatpush1.bf16.xpose.msra.mxu0 0
        %1261 = vmatprep.subr.bf16.mxu0 0
        %1262 = vmatpush1.bf16.xpose.msra.mxu0 0
        %1263 = vmatprep.subr.bf16.mxu0 0
        %1264 = vmatpush1.bf16.xpose.msra.mxu0 0
        %1265 = vmatprep.subr.bf16.mxu0 0
        %1266 = vmatpush1.bf16.xpose.msra.mxu0 0
        %1267 = vmatprep.subr.bf16.mxu0 0
        %1268 = vmatpush1.bf16.xpose.msra.mxu0 0
        %1269 = vmatprep.subr.bf16.mxu0 0
        %1270 = vmatpush1.bf16.xpose.msra.mxu0 0
        %1271 = vmatprep.subr.bf16.mxu0 0
        %1272 = vmatpush1.bf16.xpose.msra.mxu0 0
        %1273 = vmatprep.subr.bf16.mxu0 0
        %1274 = vmatpush1.bf16.xpose.msra.mxu0 0
        %1275 = vmatprep.subr.bf16.mxu0 0
        %1276 = vmatpush1.bf16.xpose.msra.mxu0 0
        %1277 = vmatprep.subr.bf16.mxu0 0
        %1278 = vmatpush1.bf16.xpose.msra.mxu0 0
        %1279 = vmatprep.subr.bf16.mxu0 0
        %1280 = vmatpush1.bf16.xpose.msra.mxu0 0
        %1281 = vmatprep.subr.bf16.mxu0 0
        %1282 = vmatpush1.bf16.xpose.msra.mxu0 0
        %1283 = vmatprep.subr.bf16.mxu0 0
        %1284 = vmatpush1.bf16.xpose.msra.mxu0 0
        %1285 = vmatprep.mubr.bf16.mxu0 0
        %1286 = vmatmul.mubr.bf16.gmra.mrb[0].mxu0 %v1248
        %v1287 = vpop.f32.mrb[0].mxu0
        %v1288 = vadd.f32 %v1198, %v1287
        %v1289 = vpop.f32.mrb[0].mxu0
        %v1290 = vpop.f32.mrb[0].mxu0
        %v1291 = vpop.f32.mrb[0].mxu0
        %1292 = vdwg.mxu0
        %v1294 = vsel %vm1200, %v892, 0
        %v1297 = vsel %vm1200, %v1042, 0
        %1299 = vmatprep.subr.bf16.mxu0 0
        %1300 = vmatpush1.bf16.xpose.msra.mxu0 %v1297
        %1301 = vmatprep.subr.bf16.mxu0 0
        %1302 = vmatpush1.bf16.xpose.msra.mxu0 0
        %1303 = vmatprep.subr.bf16.mxu0 0
        %1304 = vmatpush1.bf16.xpose.msra.mxu0 0
        %1305 = vmatprep.subr.bf16.mxu0 0
        %1306 = vmatpush1.bf16.xpose.msra.mxu0 0
        %1307 = vmatprep.subr.bf16.mxu0 0
        %1308 = vmatpush1.bf16.xpose.msra.mxu0 0
        %1309 = vmatprep.subr.bf16.mxu0 0
        %1310 = vmatpush1.bf16.xpose.msra.mxu0 0
        %1311 = vmatprep.subr.bf16.mxu0 0
        %1312 = vmatpush1.bf16.xpose.msra.mxu0 0
        %1313 = vmatprep.subr.bf16.mxu0 0
        %1314 = vmatpush1.bf16.xpose.msra.mxu0 0
        %1315 = vmatprep.subr.bf16.mxu0 0
        %1316 = vmatpush1.bf16.xpose.msra.mxu0 0
        %1317 = vmatprep.subr.bf16.mxu0 0
        %1318 = vmatpush1.bf16.xpose.msra.mxu0 0
        %1319 = vmatprep.subr.bf16.mxu0 0
        %1320 = vmatpush1.bf16.xpose.msra.mxu0 0
        %1321 = vmatprep.subr.bf16.mxu0 0
        %1322 = vmatpush1.bf16.xpose.msra.mxu0 0
        %1323 = vmatprep.subr.bf16.mxu0 0
        %1324 = vmatpush1.bf16.xpose.msra.mxu0 0
        %1325 = vmatprep.subr.bf16.mxu0 0
        %1326 = vmatpush1.bf16.xpose.msra.mxu0 0
        %1327 = vmatprep.subr.bf16.mxu0 0
        %1328 = vmatpush1.bf16.xpose.msra.mxu0 0
        %1329 = vmatprep.subr.bf16.mxu0 0
        %1330 = vmatpush1.bf16.xpose.msra.mxu0 0
        %1331 = vmatprep.mubr.bf16.mxu0 0
        %1332 = vmatmul.mubr.bf16.gmra.mrb[0].mxu0 %v1294
        %v1333 = vpop.f32.mrb[0].mxu0
        %v1334 = vadd.f32 %v1198, %v1333
        %v1335 = vpop.f32.mrb[0].mxu0
        %v1336 = vpop.f32.mrb[0].mxu0
        %v1337 = vpop.f32.mrb[0].mxu0
        %1338 = vdwg.mxu0
        %v1340 = vsel %vm1200, %v893, 0
        %v1343 = vsel %vm1200, %v1043, 0
        %1345 = vmatprep.subr.bf16.mxu0 0
        %1346 = vmatpush1.bf16.xpose.msra.mxu0 %v1343
        %1347 = vmatprep.subr.bf16.mxu0 0
        %1348 = vmatpush1.bf16.xpose.msra.mxu0 0
        %1349 = vmatprep.subr.bf16.mxu0 0
        %1350 = vmatpush1.bf16.xpose.msra.mxu0 0
        %1351 = vmatprep.subr.bf16.mxu0 0
        %1352 = vmatpush1.bf16.xpose.msra.mxu0 0
        %1353 = vmatprep.subr.bf16.mxu0 0
        %1354 = vmatpush1.bf16.xpose.msra.mxu0 0
        %1355 = vmatprep.subr.bf16.mxu0 0
        %1356 = vmatpush1.bf16.xpose.msra.mxu0 0
        %1357 = vmatprep.subr.bf16.mxu0 0
        %1358 = vmatpush1.bf16.xpose.msra.mxu0 0
        %1359 = vmatprep.subr.bf16.mxu0 0
        %1360 = vmatpush1.bf16.xpose.msra.mxu0 0
        %1361 = vmatprep.subr.bf16.mxu0 0
        %1362 = vmatpush1.bf16.xpose.msra.mxu0 0
        %1363 = vmatprep.subr.bf16.mxu0 0
        %1364 = vmatpush1.bf16.xpose.msra.mxu0 0
        %1365 = vmatprep.subr.bf16.mxu0 0
        %1366 = vmatpush1.bf16.xpose.msra.mxu0 0
        %1367 = vmatprep.subr.bf16.mxu0 0
        %1368 = vmatpush1.bf16.xpose.msra.mxu0 0
        %1369 = vmatprep.subr.bf16.mxu0 0
        %1370 = vmatpush1.bf16.xpose.msra.mxu0 0
        %1371 = vmatprep.subr.bf16.mxu0 0
        %1372 = vmatpush1.bf16.xpose.msra.mxu0 0
        %1373 = vmatprep.subr.bf16.mxu0 0
        %1374 = vmatpush1.bf16.xpose.msra.mxu0 0
        %1375 = vmatprep.subr.bf16.mxu0 0
        %1376 = vmatpush1.bf16.xpose.msra.mxu0 0
        %1377 = vmatprep.mubr.bf16.mxu0 0
        %1378 = vmatmul.mubr.bf16.gmra.mrb[0].mxu0 %v1340
        %v1379 = vpop.f32.mrb[0].mxu0
        %v1380 = vadd.f32 %v1198, %v1379
        %v1381 = vpop.f32.mrb[0].mxu0
        %v1382 = vpop.f32.mrb[0].mxu0
        %v1383 = vpop.f32.mrb[0].mxu0
        %1384 = vdwg.mxu0
        %vm1385 = vcmask 64512
        %v1386 = vsel %vm1385, %v1242, -inf
        %1387 = vmax.xlane.f32.xlu0 %v1386
        %v1388 = vpop.xlane.xlu0 %1387
        %v1389 = vsel %vm1385, %v1288, -inf
        %1390 = vmax.xlane.f32.xlu0 %v1389
        %v1391 = vpop.xlane.xlu0 %1390
        %v1392 = vsel %vm1385, %v1334, -inf
        %1393 = vmax.xlane.f32.xlu0 %v1392
        %v1394 = vpop.xlane.xlu0 %1393
        %v1395 = vsel %vm1385, %v1380, -inf
        %1396 = vmax.xlane.f32.xlu0 %v1395
        %v1397 = vpop.xlane.xlu0 %1396
        %v1398 = vsub.f32 %v1242, %v1388
        %v1399 = vsub.f32 %v1288, %v1391
        %v1400 = vsub.f32 %v1334, %v1394
        %v1401 = vsub.f32 %v1380, %v1397
        %v1402 = vmul.f32 %v1398, 1.442695
        %v1403 = vpow.pop %v1402
        %v1404 = vmul.f32 %v1399, 1.442695
        %v1405 = vpow.pop %v1404
        %v1406 = vmul.f32 %v1400, 1.442695
        %v1407 = vpow.pop %v1406
        %v1408 = vmul.f32 %v1401, 1.442695
        %v1409 = vpow.pop %v1408
        %v1410 = vsel %vm1385, %v1403, 0.0
        %1411 = vadd.xlane.f32.xlu0 %v1410
        %v1412 = vpop.xlane.xlu0 %1411
        %v1413 = vsel %vm1385, %v1405, 0.0
        %1414 = vadd.xlane.f32.xlu0 %v1413
        %v1415 = vpop.xlane.xlu0 %1414
        %v1416 = vsel %vm1385, %v1407, 0.0
        %1417 = vadd.xlane.f32.xlu0 %v1416
        %v1418 = vpop.xlane.xlu0 %1417
        %v1419 = vsel %vm1385, %v1409, 0.0
        %1420 = vadd.xlane.f32.xlu0 %v1419
        %v1421 = vpop.xlane.xlu0 %1420
        %v1422 = vrcp.pop %v1412
        %v1423 = vrcp.pop %v1415
        %v1424 = vrcp.pop %v1418
        %v1425 = vrcp.pop %v1421
        %v1426 = vmul.f32 %v1403, %v1422
        %v1427 = vmul.f32 %v1405, %v1423
        %v1428 = vmul.f32 %v1407, %v1424
        %v1429 = vmul.f32 %v1409, %v1425
        %v1430 = vpack.c.bf16 %v1426, %v1426
        %v1431 = vpack.c.bf16 %v1427, %v1427
        %v1432 = vpack.c.bf16 %v1428, %v1428
        %v1433 = vpack.c.bf16 %v1429, %v1429
        %v1435 = vsel %vm1385, %v1430, 0
        %vm1437 = vcmask 1043456
        %v1439 = vsel %vm1437, %v1190, 0
        %1441 = vmatprep.subr.bf16.mxu0 0
        %1442 = vmatpush1.bf16.msra.mxu0 %v1439
        %1443 = vmatprep.subr.bf16.mxu0 0
        %1444 = vmatpush1.bf16.msra.mxu0 0
        %1445 = vmatprep.subr.bf16.mxu0 0
        %1446 = vmatpush1.bf16.msra.mxu0 0
        %1447 = vmatprep.subr.bf16.mxu0 0
        %1448 = vmatpush1.bf16.msra.mxu0 0
        %1449 = vmatprep.subr.bf16.mxu0 0
        %1450 = vmatpush1.bf16.msra.mxu0 0
        %1451 = vmatprep.subr.bf16.mxu0 0
        %1452 = vmatpush1.bf16.msra.mxu0 0
        %1453 = vmatprep.subr.bf16.mxu0 0
        %1454 = vmatpush1.bf16.msra.mxu0 0
        %1455 = vmatprep.subr.bf16.mxu0 0
        %1456 = vmatpush1.bf16.msra.mxu0 0
        %1457 = vmatprep.subr.bf16.mxu0 0
        %1458 = vmatpush1.bf16.msra.mxu0 0
        %1459 = vmatprep.subr.bf16.mxu0 0
        %1460 = vmatpush1.bf16.msra.mxu0 0
        %1461 = vmatprep.subr.bf16.mxu0 0
        %1462 = vmatpush1.bf16.msra.mxu0 0
        %1463 = vmatprep.subr.bf16.mxu0 0
        %1464 = vmatpush1.bf16.msra.mxu0 0
        %1465 = vmatprep.subr.bf16.mxu0 0
        %1466 = vmatpush1.bf16.msra.mxu0 0
        %1467 = vmatprep.subr.bf16.mxu0 0
        %1468 = vmatpush1.bf16.msra.mxu0 0
        %1469 = vmatprep.subr.bf16.mxu0 0
        %1470 = vmatpush1.bf16.msra.mxu0 0
        %1471 = vmatprep.subr.bf16.mxu0 0
        %1472 = vmatpush1.bf16.msra.mxu0 0
        %1473 = vmatprep.mubr.bf16.mxu0 0
        %1474 = vmatmul.mubr.bf16.gmra.mrb[0].mxu0 %v1435
        %v1475 = vpop.f32.mrb[0].mxu0
        %v1476 = vadd.f32 0.0, %v1475
        %v1477 = vpop.f32.mrb[0].mxu0
        %v1478 = vpop.f32.mrb[0].mxu0
        %v1479 = vpop.f32.mrb[0].mxu0
        %1480 = vdwg.mxu0
        %v1482 = vsel %vm1385, %v1431, 0
        %v1485 = vsel %vm1437, %v1191, 0
        %1487 = vmatprep.subr.bf16.mxu0 0
        %1488 = vmatpush1.bf16.msra.mxu0 %v1485
        %1489 = vmatprep.subr.bf16.mxu0 0
        %1490 = vmatpush1.bf16.msra.mxu0 0
        %1491 = vmatprep.subr.bf16.mxu0 0
        %1492 = vmatpush1.bf16.msra.mxu0 0
        %1493 = vmatprep.subr.bf16.mxu0 0
        %1494 = vmatpush1.bf16.msra.mxu0 0
        %1495 = vmatprep.subr.bf16.mxu0 0
        %1496 = vmatpush1.bf16.msra.mxu0 0
        %1497 = vmatprep.subr.bf16.mxu0 0
        %1498 = vmatpush1.bf16.msra.mxu0 0
        %1499 = vmatprep.subr.bf16.mxu0 0
        %1500 = vmatpush1.bf16.msra.mxu0 0
        %1501 = vmatprep.subr.bf16.mxu0 0
        %1502 = vmatpush1.bf16.msra.mxu0 0
        %1503 = vmatprep.subr.bf16.mxu0 0
        %1504 = vmatpush1.bf16.msra.mxu0 0
        %1505 = vmatprep.subr.bf16.mxu0 0
        %1506 = vmatpush1.bf16.msra.mxu0 0
        %1507 = vmatprep.subr.bf16.mxu0 0
        %1508 = vmatpush1.bf16.msra.mxu0 0
        %1509 = vmatprep.subr.bf16.mxu0 0
        %1510 = vmatpush1.bf16.msra.mxu0 0
        %1511 = vmatprep.subr.bf16.mxu0 0
        %1512 = vmatpush1.bf16.msra.mxu0 0
        %1513 = vmatprep.subr.bf16.mxu0 0
        %1514 = vmatpush1.bf16.msra.mxu0 0
        %1515 = vmatprep.subr.bf16.mxu0 0
        %1516 = vmatpush1.bf16.msra.mxu0 0
        %1517 = vmatprep.subr.bf16.mxu0 0
        %1518 = vmatpush1.bf16.msra.mxu0 0
        %1519 = vmatprep.mubr.bf16.mxu0 0
        %1520 = vmatmul.mubr.bf16.gmra.mrb[0].mxu0 %v1482
        %v1521 = vpop.f32.mrb[0].mxu0
        %v1522 = vadd.f32 0.0, %v1521
        %v1523 = vpop.f32.mrb[0].mxu0
        %v1524 = vpop.f32.mrb[0].mxu0
        %v1525 = vpop.f32.mrb[0].mxu0
        %1526 = vdwg.mxu0
        %v1528 = vsel %vm1385, %v1432, 0
        %v1531 = vsel %vm1437, %v1192, 0
        %1533 = vmatprep.subr.bf16.mxu0 0
        %1534 = vmatpush1.bf16.msra.mxu0 %v1531
        %1535 = vmatprep.subr.bf16.mxu0 0
        %1536 = vmatpush1.bf16.msra.mxu0 0
        %1537 = vmatprep.subr.bf16.mxu0 0
        %1538 = vmatpush1.bf16.msra.mxu0 0
        %1539 = vmatprep.subr.bf16.mxu0 0
        %1540 = vmatpush1.bf16.msra.mxu0 0
        %1541 = vmatprep.subr.bf16.mxu0 0
        %1542 = vmatpush1.bf16.msra.mxu0 0
        %1543 = vmatprep.subr.bf16.mxu0 0
        %1544 = vmatpush1.bf16.msra.mxu0 0
        %1545 = vmatprep.subr.bf16.mxu0 0
        %1546 = vmatpush1.bf16.msra.mxu0 0
        %1547 = vmatprep.subr.bf16.mxu0 0
        %1548 = vmatpush1.bf16.msra.mxu0 0
        %1549 = vmatprep.subr.bf16.mxu0 0
        %1550 = vmatpush1.bf16.msra.mxu0 0
        %1551 = vmatprep.subr.bf16.mxu0 0
        %1552 = vmatpush1.bf16.msra.mxu0 0
        %1553 = vmatprep.subr.bf16.mxu0 0
        %1554 = vmatpush1.bf16.msra.mxu0 0
        %1555 = vmatprep.subr.bf16.mxu0 0
        %1556 = vmatpush1.bf16.msra.mxu0 0
        %1557 = vmatprep.subr.bf16.mxu0 0
        %1558 = vmatpush1.bf16.msra.mxu0 0
        %1559 = vmatprep.subr.bf16.mxu0 0
        %1560 = vmatpush1.bf16.msra.mxu0 0
        %1561 = vmatprep.subr.bf16.mxu0 0
        %1562 = vmatpush1.bf16.msra.mxu0 0
        %1563 = vmatprep.subr.bf16.mxu0 0
        %1564 = vmatpush1.bf16.msra.mxu0 0
        %1565 = vmatprep.mubr.bf16.mxu0 0
        %1566 = vmatmul.mubr.bf16.gmra.mrb[0].mxu0 %v1528
        %v1567 = vpop.f32.mrb[0].mxu0
        %v1568 = vadd.f32 0.0, %v1567
        %v1569 = vpop.f32.mrb[0].mxu0
        %v1570 = vpop.f32.mrb[0].mxu0
        %v1571 = vpop.f32.mrb[0].mxu0
        %1572 = vdwg.mxu0
        %v1574 = vsel %vm1385, %v1433, 0
        %v1577 = vsel %vm1437, %v1193, 0
        %1579 = vmatprep.subr.bf16.mxu0 0
        %1580 = vmatpush1.bf16.msra.mxu0 %v1577
        %1581 = vmatprep.subr.bf16.mxu0 0
        %1582 = vmatpush1.bf16.msra.mxu0 0
        %1583 = vmatprep.subr.bf16.mxu0 0
        %1584 = vmatpush1.bf16.msra.mxu0 0
        %1585 = vmatprep.subr.bf16.mxu0 0
        %1586 = vmatpush1.bf16.msra.mxu0 0
        %1587 = vmatprep.subr.bf16.mxu0 0
        %1588 = vmatpush1.bf16.msra.mxu0 0
        %1589 = vmatprep.subr.bf16.mxu0 0
        %1590 = vmatpush1.bf16.msra.mxu0 0
        %1591 = vmatprep.subr.bf16.mxu0 0
        %1592 = vmatpush1.bf16.msra.mxu0 0
        %1593 = vmatprep.subr.bf16.mxu0 0
        %1594 = vmatpush1.bf16.msra.mxu0 0
        %1595 = vmatprep.subr.bf16.mxu0 0
        %1596 = vmatpush1.bf16.msra.mxu0 0
        %1597 = vmatprep.subr.bf16.mxu0 0
        %1598 = vmatpush1.bf16.msra.mxu0 0
        %1599 = vmatprep.subr.bf16.mxu0 0
        %1600 = vmatpush1.bf16.msra.mxu0 0
        %1601 = vmatprep.subr.bf16.mxu0 0
        %1602 = vmatpush1.bf16.msra.mxu0 0
        %1603 = vmatprep.subr.bf16.mxu0 0
        %1604 = vmatpush1.bf16.msra.mxu0 0
        %1605 = vmatprep.subr.bf16.mxu0 0
        %1606 = vmatpush1.bf16.msra.mxu0 0
        %1607 = vmatprep.subr.bf16.mxu0 0
        %1608 = vmatpush1.bf16.msra.mxu0 0
        %1609 = vmatprep.subr.bf16.mxu0 0
        %1610 = vmatpush1.bf16.msra.mxu0 0
        %1611 = vmatprep.mubr.bf16.mxu0 0
        %1612 = vmatmul.mubr.bf16.gmra.mrb[0].mxu0 %v1574
        %v1613 = vpop.f32.mrb[0].mxu0
        %v1614 = vadd.f32 0.0, %v1613
        %v1615 = vpop.f32.mrb[0].mxu0
        %v1616 = vpop.f32.mrb[0].mxu0
        %v1617 = vpop.f32.mrb[0].mxu0
        %1618 = vdwg.mxu0
        %v1619 = vcombine.low %v1476, %v1568
        %v1620 = vcombine.high %v1476, %v1568
        %v1622 = vunpack.c.l.s4 1983009808
        %v1623 = vunpack.c.0.s8 %v1622
        %v1624 = vlaneseq
        %v1625 = vshrl.u32 %v1624, 7
        %v1626 = vsub.s32 %v1623, %v1625
        %v1627 = vrot.slane %v1619, %v1626
        %v1629 = vunpack.c.l.s4 1983009808
        %v1630 = vunpack.c.0.s8 %v1629
        %v1631 = vlaneseq
        %v1632 = vshrl.u32 %v1631, 7
        %v1633 = vsub.s32 %v1630, %v1632
        %v1634 = vrot.slane %v1620, %v1633
        %v1635 = vcombine.low %v1522, %v1614
        %v1636 = vcombine.high %v1522, %v1614
        %v1638 = vunpack.c.l.s4 1983009808
        %v1639 = vunpack.c.0.s8 %v1638
        %v1640 = vlaneseq
        %v1641 = vshrl.u32 %v1640, 7
        %v1642 = vsub.s32 %v1639, %v1641
        %v1643 = vrot.slane %v1635, %v1642
        %v1645 = vunpack.c.l.s4 1983009808
        %v1646 = vunpack.c.0.s8 %v1645
        %v1647 = vlaneseq
        %v1648 = vshrl.u32 %v1647, 7
        %v1649 = vsub.s32 %v1646, %v1648
        %v1650 = vrot.slane %v1636, %v1649
        %v1651 = vcombine.low %v1627, %v1643
        %v1652 = vcombine.high %v1627, %v1643
        %v1654 = vunpack.c.l.s4 1934713408
        %v1655 = vunpack.c.0.s8 %v1654
        %v1656 = vlaneseq
        %v1657 = vshrl.u32 %v1656, 7
        %v1658 = vsub.s32 %v1655, %v1657
        %v1659 = vrot.slane %v1651, %v1658
        %v1661 = vunpack.c.l.s4 1934713408
        %v1662 = vunpack.c.0.s8 %v1661
        %v1663 = vlaneseq
        %v1664 = vshrl.u32 %v1663, 7
        %v1665 = vsub.s32 %v1662, %v1664
        %v1666 = vrot.slane %v1652, %v1665
        %v1667 = vcombine.low %v1634, %v1650
        %v1668 = vcombine.high %v1634, %v1650
        %v1670 = vunpack.c.l.s4 1934713408
        %v1671 = vunpack.c.0.s8 %v1670
        %v1672 = vlaneseq
        %v1673 = vshrl.u32 %v1672, 7
        %v1674 = vsub.s32 %v1671, %v1673
        %v1675 = vrot.slane %v1667, %v1674
        %v1677 = vunpack.c.l.s4 1934713408
        %v1678 = vunpack.c.0.s8 %v1677
        %v1679 = vlaneseq
        %v1680 = vshrl.u32 %v1679, 7
        %v1681 = vsub.s32 %v1678, %v1680
        %v1682 = vrot.slane %v1668, %v1681
        %v1683 = vcombine.high %v1659, 0.0
        %v1684 = vcombine.high %v1666, 0.0
        %v1685 = vcombine.high %v1675, 0.0
        %v1686 = vcombine.high %v1682, 0.0
        %v1687 = vcombine.low %v1659, %v1666
        %v1689 = vunpack.c.l.s4 1983009808
        %v1690 = vunpack.c.0.s8 %v1689
        %v1691 = vlaneseq
        %v1692 = vshrl.u32 %v1691, 7
        %v1693 = vsub.s32 %v1690, %v1692
        %v1694 = vrot.slane %v1687, %v1693
        %v1695 = vcombine.low %v1683, %v1684
        %v1697 = vunpack.c.l.s4 1983009808
        %v1698 = vunpack.c.0.s8 %v1697
        %v1699 = vlaneseq
        %v1700 = vshrl.u32 %v1699, 7
        %v1701 = vsub.s32 %v1698, %v1700
        %v1702 = vrot.slane %v1695, %v1701
        %v1703 = vcombine.low %v1675, %v1682
        %v1705 = vunpack.c.l.s4 1983009808
        %v1706 = vunpack.c.0.s8 %v1705
        %v1707 = vlaneseq
        %v1708 = vshrl.u32 %v1707, 7
        %v1709 = vsub.s32 %v1706, %v1708
        %v1710 = vrot.slane %v1703, %v1709
        %v1711 = vcombine.low %v1685, %v1686
        %v1713 = vunpack.c.l.s4 1983009808
        %v1714 = vunpack.c.0.s8 %v1713
        %v1715 = vlaneseq
        %v1716 = vshrl.u32 %v1715, 7
        %v1717 = vsub.s32 %v1714, %v1716
        %v1718 = vrot.slane %v1711, %v1717
        %v1719 = vcombine.low %v1694, %v1702
        %v1720 = vcombine.high %v1694, %v1702
        %v1722 = vunpack.c.l.s4 1934713408
        %v1723 = vunpack.c.0.s8 %v1722
        %v1724 = vlaneseq
        %v1725 = vshrl.u32 %v1724, 7
        %v1726 = vsub.s32 %v1723, %v1725
        %v1727 = vrot.slane %v1719, %v1726
        %v1729 = vunpack.c.l.s4 1934713408
        %v1730 = vunpack.c.0.s8 %v1729
        %v1731 = vlaneseq
        %v1732 = vshrl.u32 %v1731, 7
        %v1733 = vsub.s32 %v1730, %v1732
        %v1734 = vrot.slane %v1720, %v1733
        %v1735 = vcombine.low %v1710, %v1718
        %v1736 = vcombine.high %v1710, %v1718
        %v1738 = vunpack.c.l.s4 1934713408
        %v1739 = vunpack.c.0.s8 %v1738
        %v1740 = vlaneseq
        %v1741 = vshrl.u32 %v1740, 7
        %v1742 = vsub.s32 %v1739, %v1741
        %v1743 = vrot.slane %v1735, %v1742
        %v1745 = vunpack.c.l.s4 1934713408
        %v1746 = vunpack.c.0.s8 %v1745
        %v1747 = vlaneseq
        %v1748 = vshrl.u32 %v1747, 7
        %v1749 = vsub.s32 %v1746, %v1748
        %v1750 = vrot.slane %v1736, %v1749
        %v1751 = vcombine.low %v1727, %v1743
        %v1752 = vcombine.high %v1727, %v1743
        %v1753 = vcombine.low %v1734, %v1750
        %v1754 = vcombine.high %v1734, %v1750
        %1756 = vrot.lane.b32.xlu0 %v1752, 32
        %v1757 = vpop.permute.xlu0 %1756
        %1760 = vrot.lane.b32.xlu0 %v1753, 64
        %v1761 = vpop.permute.xlu0 %1760
        %1764 = vrot.lane.b32.xlu0 %v1754, 96
        %v1765 = vpop.permute.xlu0 %1764
        %v1767 = vsel %vm1200, %v1751, %v1757
        %vm1768 = vcmask 523264
        %v1769 = vsel %vm1768, %v1767, %v1761
        %vm1770 = vcmask 785408
        %v1771 = vsel %vm1770, %v1769, %v1765
        %v1772 = vpack.c.bf16 %v1771, %v1771
        %v1773 = vlaneseq
        %v1774 = vshrl.u32 %v1773, 7
        %v1775 = vsub.s32 1, %v1774
        %v1776 = vrot.slane %v518, %v1775
        %v1777 = vunpack.c.h.b16 %v391
        %v1778 = vunpack.c.h.b16 %v395
        %v1779 = vunpack.c.h.b16 %v399
        %v1780 = vunpack.c.h.b16 %v403
        %v1781 = vunpack.c.h.b16 %v407
        %v1782 = vunpack.c.h.b16 %v411
        %v1783 = vunpack.c.h.b16 %v415
        %v1784 = vunpack.c.h.b16 %v419
        %v1785 = vunpack.c.h.b16 %v423
        %v1786 = vunpack.c.h.b16 %v427
        %v1787 = vunpack.c.h.b16 %v431
        %v1788 = vunpack.c.h.b16 %v435
        %v1789 = vunpack.c.h.b16 %v439
        %v1790 = vunpack.c.h.b16 %v443
        %v1791 = vunpack.c.h.b16 %v447
        %v1792 = vunpack.c.h.b16 %v451
        %v1793 = vpack.c.b16 %v1778, %v1777
        %v1794 = vpack.c.b16 %v1780, %v1779
        %v1795 = vpack.c.b16 %v1782, %v1781
        %v1796 = vpack.c.b16 %v1784, %v1783
        %v1797 = vpack.c.b16 %v1786, %v1785
        %v1798 = vpack.c.b16 %v1788, %v1787
        %v1799 = vpack.c.b16 %v1790, %v1789
        %v1800 = vpack.c.b16 %v1792, %v1791
        %1809 = vmatprep.subr.bf16.mxu0 0
        %1810 = vmatpush1.bf16.msra.mxu0 %v1793
        %1811 = vmatprep.subr.bf16.mxu0 0
        %1812 = vmatpush1.bf16.msra.mxu0 %v1794
        %1813 = vmatprep.subr.bf16.mxu0 0
        %1814 = vmatpush1.bf16.msra.mxu0 %v1795
        %1815 = vmatprep.subr.bf16.mxu0 0
        %1816 = vmatpush1.bf16.msra.mxu0 %v1796
        %1817 = vmatprep.subr.bf16.mxu0 0
        %1818 = vmatpush1.bf16.msra.mxu0 %v1797
        %1819 = vmatprep.subr.bf16.mxu0 0
        %1820 = vmatpush1.bf16.msra.mxu0 %v1798
        %1821 = vmatprep.subr.bf16.mxu0 0
        %1822 = vmatpush1.bf16.msra.mxu0 %v1799
        %1823 = vmatprep.subr.bf16.mxu0 0
        %1824 = vmatpush1.bf16.msra.mxu0 %v1800
        %1825 = vmatprep.subr.bf16.mxu0 0
        %1826 = vmatpush1.bf16.msra.mxu0 0
        %1827 = vmatprep.subr.bf16.mxu0 0
        %1828 = vmatpush1.bf16.msra.mxu0 0
        %1829 = vmatprep.subr.bf16.mxu0 0
        %1830 = vmatpush1.bf16.msra.mxu0 0
        %1831 = vmatprep.subr.bf16.mxu0 0
        %1832 = vmatpush1.bf16.msra.mxu0 0
        %1833 = vmatprep.subr.bf16.mxu0 0
        %1834 = vmatpush1.bf16.msra.mxu0 0
        %1835 = vmatprep.subr.bf16.mxu0 0
        %1836 = vmatpush1.bf16.msra.mxu0 0
        %1837 = vmatprep.subr.bf16.mxu0 0
        %1838 = vmatpush1.bf16.msra.mxu0 0
        %1839 = vmatprep.subr.bf16.mxu0 0
        %1840 = vmatpush1.bf16.msra.mxu0 0
        %1841 = vmatprep.mubr.bf16.mxu0 0
        %1842 = vmatmul.mubr.bf16.gmra.mrb[0].mxu0 %v1772
        %v1843 = vpop.f32.mrb[0].mxu0
        %v1844 = vadd.f32 %v1776, %v1843
        %v1845 = vpop.f32.mrb[0].mxu0
        %v1846 = vpop.f32.mrb[0].mxu0
        %v1847 = vpop.f32.mrb[0].mxu0
        %1848 = vdwg.mxu0
        %v1849 = vadd.f32 %v388, %v1844
        %1850 = vadd.xlane.f32.xlu0 %v1849
        %v1851 = vpop.xlane.xlu0 %1850
        %v1852 = vrcp.pop 128.0
        %v1853 = vmul.f32 %v1851, %v1852
        %v1854 = vsub.f32 %v1849, %v1853
        %v1855 = vmul.f32 %v1854, %v1854
        %1856 = vadd.xlane.f32.xlu0 %v1855
        %v1857 = vpop.xlane.xlu0 %1856
        %v1858 = vmul.f32 %v1857, %v1852
        %v1859 = vadd.f32 %v1858, 1e-12
        %v1860 = vrsqrt.pop %v1859
        %v1861 = vmul.f32 %v1854, %v1860
        %v1862 = vlaneseq
        %v1863 = vshrl.u32 %v1862, 7
        %v1864 = vsub.s32 4, %v1863
        %v1865 = vrot.slane %v518, %v1864
        %v1866 = vmul.f32 %v1861, %v1865
        %v1867 = vlaneseq
        %v1868 = vshrl.u32 %v1867, 7
        %v1869 = vsub.s32 5, %v1868
        %v1870 = vrot.slane %v518, %v1869
        %v1871 = vadd.f32 %v1866, %v1870
        %v1872 = vpack.c.bf16 %v1871, %v1871
        %v1873 = vlaneseq
        %v1874 = vshrl.u32 %v1873, 7
        %v1875 = vsub.s32 2, %v1874
        %v1876 = vrot.slane %v518, %v1875
        %v1877 = vlaneseq
        %v1878 = vshrl.u32 %v1877, 7
        %v1879 = vsub.s32 2, %v1878
        %v1880 = vrot.slane %v519, %v1879
        %v1881 = vlaneseq
        %v1882 = vshrl.u32 %v1881, 7
        %v1883 = vsub.s32 2, %v1882
        %v1884 = vrot.slane %v520, %v1883
        %v1885 = vlaneseq
        %v1886 = vshrl.u32 %v1885, 7
        %v1887 = vsub.s32 2, %v1886
        %v1888 = vrot.slane %v521, %v1887
        %v1921 = vunpack.c.l.b16 %v392
        %v1922 = vunpack.c.h.b16 %v392
        %v1923 = vunpack.c.l.b16 %v393
        %v1924 = vunpack.c.h.b16 %v393
        %v1925 = vunpack.c.l.b16 %v396
        %v1926 = vunpack.c.h.b16 %v396
        %v1927 = vunpack.c.l.b16 %v397
        %v1928 = vunpack.c.h.b16 %v397
        %v1929 = vunpack.c.l.b16 %v400
        %v1930 = vunpack.c.h.b16 %v400
        %v1931 = vunpack.c.l.b16 %v401
        %v1932 = vunpack.c.h.b16 %v401
        %v1933 = vunpack.c.l.b16 %v404
        %v1934 = vunpack.c.h.b16 %v404
        %v1935 = vunpack.c.l.b16 %v405
        %v1936 = vunpack.c.h.b16 %v405
        %v1937 = vunpack.c.l.b16 %v408
        %v1938 = vunpack.c.h.b16 %v408
        %v1939 = vunpack.c.l.b16 %v409
        %v1940 = vunpack.c.h.b16 %v409
        %v1941 = vunpack.c.l.b16 %v412
        %v1942 = vunpack.c.h.b16 %v412
        %v1943 = vunpack.c.l.b16 %v413
        %v1944 = vunpack.c.h.b16 %v413
        %v1945 = vunpack.c.l.b16 %v416
        %v1946 = vunpack.c.h.b16 %v416
        %v1947 = vunpack.c.l.b16 %v417
        %v1948 = vunpack.c.h.b16 %v417
        %v1949 = vunpack.c.l.b16 %v420
        %v1950 = vunpack.c.h.b16 %v420
        %v1951 = vunpack.c.l.b16 %v421
        %v1952 = vunpack.c.h.b16 %v421
        %v1953 = vunpack.c.l.b16 %v424
        %v1954 = vunpack.c.h.b16 %v424
        %v1955 = vunpack.c.l.b16 %v425
        %v1956 = vunpack.c.h.b16 %v425
        %v1957 = vunpack.c.l.b16 %v428
        %v1958 = vunpack.c.h.b16 %v428
        %v1959 = vunpack.c.l.b16 %v429
        %v1960 = vunpack.c.h.b16 %v429
        %v1961 = vunpack.c.l.b16 %v432
        %v1962 = vunpack.c.h.b16 %v432
        %v1963 = vunpack.c.l.b16 %v433
        %v1964 = vunpack.c.h.b16 %v433
        %v1965 = vunpack.c.l.b16 %v436
        %v1966 = vunpack.c.h.b16 %v436
        %v1967 = vunpack.c.l.b16 %v437
        %v1968 = vunpack.c.h.b16 %v437
        %v1969 = vunpack.c.l.b16 %v440
        %v1970 = vunpack.c.h.b16 %v440
        %v1971 = vunpack.c.l.b16 %v441
        %v1972 = vunpack.c.h.b16 %v441
        %v1973 = vunpack.c.l.b16 %v444
        %v1974 = vunpack.c.h.b16 %v444
        %v1975 = vunpack.c.l.b16 %v445
        %v1976 = vunpack.c.h.b16 %v445
        %v1977 = vunpack.c.l.b16 %v448
        %v1978 = vunpack.c.h.b16 %v448
        %v1979 = vunpack.c.l.b16 %v449
        %v1980 = vunpack.c.h.b16 %v449
        %v1981 = vunpack.c.l.b16 %v452
        %v1982 = vunpack.c.h.b16 %v452
        %v1983 = vunpack.c.l.b16 %v453
        %v1984 = vunpack.c.h.b16 %v453
        %v1985 = vpack.c.b16 %v1925, %v1921
        %v1986 = vpack.c.b16 %v1926, %v1922
        %v1987 = vpack.c.b16 %v1927, %v1923
        %v1988 = vpack.c.b16 %v1928, %v1924
        %v1989 = vpack.c.b16 %v1933, %v1929
        %v1990 = vpack.c.b16 %v1934, %v1930
        %v1991 = vpack.c.b16 %v1935, %v1931
        %v1992 = vpack.c.b16 %v1936, %v1932
        %v1993 = vpack.c.b16 %v1941, %v1937
        %v1994 = vpack.c.b16 %v1942, %v1938
        %v1995 = vpack.c.b16 %v1943, %v1939
        %v1996 = vpack.c.b16 %v1944, %v1940
        %v1997 = vpack.c.b16 %v1949, %v1945
        %v1998 = vpack.c.b16 %v1950, %v1946
        %v1999 = vpack.c.b16 %v1951, %v1947
        %v2000 = vpack.c.b16 %v1952, %v1948
        %v2001 = vpack.c.b16 %v1957, %v1953
        %v2002 = vpack.c.b16 %v1958, %v1954
        %v2003 = vpack.c.b16 %v1959, %v1955
        %v2004 = vpack.c.b16 %v1960, %v1956
        %v2005 = vpack.c.b16 %v1965, %v1961
        %v2006 = vpack.c.b16 %v1966, %v1962
        %v2007 = vpack.c.b16 %v1967, %v1963
        %v2008 = vpack.c.b16 %v1968, %v1964
        %v2009 = vpack.c.b16 %v1973, %v1969
        %v2010 = vpack.c.b16 %v1974, %v1970
        %v2011 = vpack.c.b16 %v1975, %v1971
        %v2012 = vpack.c.b16 %v1976, %v1972
        %v2013 = vpack.c.b16 %v1981, %v1977
        %v2014 = vpack.c.b16 %v1982, %v1978
        %v2015 = vpack.c.b16 %v1983, %v1979
        %v2016 = vpack.c.b16 %v1984, %v1980
        %2049 = vmatprep.subr.bf16.mxu0 %v1986
        %2050 = vmatpush1.bf16.msra.mxu0 %v1985
        %2051 = vmatprep.subr.bf16.mxu0 %v1990
        %2052 = vmatpush1.bf16.msra.mxu0 %v1989
        %2053 = vmatprep.subr.bf16.mxu0 %v1994
        %2054 = vmatpush1.bf16.msra.mxu0 %v1993
        %2055 = vmatprep.subr.bf16.mxu0 %v1998
        %2056 = vmatpush1.bf16.msra.mxu0 %v1997
        %2057 = vmatprep.subr.bf16.mxu0 %v2002
        %2058 = vmatpush1.bf16.msra.mxu0 %v2001
        %2059 = vmatprep.subr.bf16.mxu0 %v2006
        %2060 = vmatpush1.bf16.msra.mxu0 %v2005
        %2061 = vmatprep.subr.bf16.mxu0 %v2010
        %2062 = vmatpush1.bf16.msra.mxu0 %v2009
        %2063 = vmatprep.subr.bf16.mxu0 %v2014
        %2064 = vmatpush1.bf16.msra.mxu0 %v2013
        %2065 = vmatprep.subr.bf16.mxu0 0
        %2066 = vmatpush1.bf16.msra.mxu0 0
        %2067 = vmatprep.subr.bf16.mxu0 0
        %2068 = vmatpush1.bf16.msra.mxu0 0
        %2069 = vmatprep.subr.bf16.mxu0 0
        %2070 = vmatpush1.bf16.msra.mxu0 0
        %2071 = vmatprep.subr.bf16.mxu0 0
        %2072 = vmatpush1.bf16.msra.mxu0 0
        %2073 = vmatprep.subr.bf16.mxu0 0
        %2074 = vmatpush1.bf16.msra.mxu0 0
        %2075 = vmatprep.subr.bf16.mxu0 0
        %2076 = vmatpush1.bf16.msra.mxu0 0
        %2077 = vmatprep.subr.bf16.mxu0 0
        %2078 = vmatpush1.bf16.msra.mxu0 0
        %2079 = vmatprep.subr.bf16.mxu0 0
        %2080 = vmatpush1.bf16.msra.mxu0 0
        %2081 = vmatprep.mubr.bf16.mxu0 0
        %2082 = vmatmul.mubr.bf16.gmra.mrb[0].mxu0 %v1872
        %v2083 = vpop.f32.mrb[0].mxu0
        %v2084 = vadd.f32 %v1876, %v2083
        %v2085 = vpop.f32.mrb[0].mxu0
        %v2086 = vadd.f32 %v1880, %v2085
        %v2087 = vpop.f32.mrb[0].mxu0
        %v2088 = vpop.f32.mrb[0].mxu0
        %2089 = vdwg.mxu0
        %2090 = vmatprep.subr.bf16.mxu0 %v1988
        %2091 = vmatpush1.bf16.msra.mxu0 %v1987
        %2092 = vmatprep.subr.bf16.mxu0 %v1992
        %2093 = vmatpush1.bf16.msra.mxu0 %v1991
        %2094 = vmatprep.subr.bf16.mxu0 %v1996
        %2095 = vmatpush1.bf16.msra.mxu0 %v1995
        %2096 = vmatprep.subr.bf16.mxu0 %v2000
        %2097 = vmatpush1.bf16.msra.mxu0 %v1999
        %2098 = vmatprep.subr.bf16.mxu0 %v2004
        %2099 = vmatpush1.bf16.msra.mxu0 %v2003
        %2100 = vmatprep.subr.bf16.mxu0 %v2008
        %2101 = vmatpush1.bf16.msra.mxu0 %v2007
        %2102 = vmatprep.subr.bf16.mxu0 %v2012
        %2103 = vmatpush1.bf16.msra.mxu0 %v2011
        %2104 = vmatprep.subr.bf16.mxu0 %v2016
        %2105 = vmatpush1.bf16.msra.mxu0 %v2015
        %2106 = vmatprep.subr.bf16.mxu0 0
        %2107 = vmatpush1.bf16.msra.mxu0 0
        %2108 = vmatprep.subr.bf16.mxu0 0
        %2109 = vmatpush1.bf16.msra.mxu0 0
        %2110 = vmatprep.subr.bf16.mxu0 0
        %2111 = vmatpush1.bf16.msra.mxu0 0
        %2112 = vmatprep.subr.bf16.mxu0 0
        %2113 = vmatpush1.bf16.msra.mxu0 0
        %2114 = vmatprep.subr.bf16.mxu0 0
        %2115 = vmatpush1.bf16.msra.mxu0 0
        %2116 = vmatprep.subr.bf16.mxu0 0
        %2117 = vmatpush1.bf16.msra.mxu0 0
        %2118 = vmatprep.subr.bf16.mxu0 0
        %2119 = vmatpush1.bf16.msra.mxu0 0
        %2120 = vmatprep.subr.bf16.mxu0 0
        %2121 = vmatpush1.bf16.msra.mxu0 0
        %2122 = vmatprep.mubr.bf16.mxu0 0
        %2123 = vmatmul.mubr.bf16.gmra.mrb[0].mxu0 %v1872
        %v2124 = vpop.f32.mrb[0].mxu0
        %v2125 = vadd.f32 %v1884, %v2124
        %v2126 = vpop.f32.mrb[0].mxu0
        %v2127 = vadd.f32 %v1888, %v2126
        %v2128 = vpop.f32.mrb[0].mxu0
        %v2129 = vpop.f32.mrb[0].mxu0
        %2130 = vdwg.mxu0
        %v2131 = vmul.f32 %v2084, %v2084
        %v2132 = vmul.f32 %v2086, %v2086
        %v2133 = vmul.f32 %v2125, %v2125
        %v2134 = vmul.f32 %v2127, %v2127
        %v2135 = vmul.f32 %v2084, %v2131
        %v2136 = vmul.f32 %v2086, %v2132
        %v2137 = vmul.f32 %v2125, %v2133
        %v2138 = vmul.f32 %v2127, %v2134
        %v2139 = vmul.f32 %v2135, 0.044715
        %v2140 = vmul.f32 %v2136, 0.044715
        %v2141 = vmul.f32 %v2137, 0.044715
        %v2142 = vmul.f32 %v2138, 0.044715
        %v2143 = vadd.f32 %v2084, %v2139
        %v2144 = vadd.f32 %v2086, %v2140
        %v2145 = vadd.f32 %v2125, %v2141
        %v2146 = vadd.f32 %v2127, %v2142
        %v2147 = vmul.f32 %v2143, 0.7978846
        %v2148 = vmul.f32 %v2144, 0.7978846
        %v2149 = vmul.f32 %v2145, 0.7978846
        %v2150 = vmul.f32 %v2146, 0.7978846
        %v2151 = vtanh.pop %v2147
        %v2152 = vtanh.pop %v2148
        %v2153 = vtanh.pop %v2149
        %v2154 = vtanh.pop %v2150
        %v2155 = vadd.f32 %v2151, 1.0
        %v2156 = vadd.f32 %v2152, 1.0
        %v2157 = vadd.f32 %v2153, 1.0
        %v2158 = vadd.f32 %v2154, 1.0
        %v2159 = vmul.f32 %v2155, 0.5
        %v2160 = vmul.f32 %v2156, 0.5
        %v2161 = vmul.f32 %v2157, 0.5
        %v2162 = vmul.f32 %v2158, 0.5
        %v2163 = vmul.f32 %v2084, %v2159
        %v2164 = vmul.f32 %v2086, %v2160
        %v2165 = vmul.f32 %v2125, %v2161
        %v2166 = vmul.f32 %v2127, %v2162
        %v2167 = vpack.c.bf16 %v2163, %v2163
        %v2168 = vpack.c.bf16 %v2164, %v2164
        %v2169 = vpack.c.bf16 %v2165, %v2165
        %v2170 = vpack.c.bf16 %v2166, %v2166
        %v2171 = vlaneseq
        %v2172 = vshrl.u32 %v2171, 7
        %v2173 = vsub.s32 3, %v2172
        %v2174 = vrot.slane %v518, %v2173
        %v2239 = vunpack.c.l.b16 %v454
        %v2240 = vunpack.c.l.b16 %v455
        %v2241 = vunpack.c.l.b16 %v456
        %v2242 = vunpack.c.l.b16 %v457
        %v2243 = vunpack.c.l.b16 %v458
        %v2244 = vunpack.c.l.b16 %v459
        %v2245 = vunpack.c.l.b16 %v460
        %v2246 = vunpack.c.l.b16 %v461
        %v2247 = vunpack.c.l.b16 %v462
        %v2248 = vunpack.c.l.b16 %v463
        %v2249 = vunpack.c.l.b16 %v464
        %v2250 = vunpack.c.l.b16 %v465
        %v2251 = vunpack.c.l.b16 %v466
        %v2252 = vunpack.c.l.b16 %v467
        %v2253 = vunpack.c.l.b16 %v468
        %v2254 = vunpack.c.l.b16 %v469
        %v2255 = vunpack.c.l.b16 %v470
        %v2256 = vunpack.c.l.b16 %v471
        %v2257 = vunpack.c.l.b16 %v472
        %v2258 = vunpack.c.l.b16 %v473
        %v2259 = vunpack.c.l.b16 %v474
        %v2260 = vunpack.c.l.b16 %v475
        %v2261 = vunpack.c.l.b16 %v476
        %v2262 = vunpack.c.l.b16 %v477
        %v2263 = vunpack.c.l.b16 %v478
        %v2264 = vunpack.c.l.b16 %v479
        %v2265 = vunpack.c.l.b16 %v480
        %v2266 = vunpack.c.l.b16 %v481
        %v2267 = vunpack.c.l.b16 %v482
        %v2268 = vunpack.c.l.b16 %v483
        %v2269 = vunpack.c.l.b16 %v484
        %v2270 = vunpack.c.l.b16 %v485
        %v2271 = vunpack.c.l.b16 %v486
        %v2272 = vunpack.c.l.b16 %v487
        %v2273 = vunpack.c.l.b16 %v488
        %v2274 = vunpack.c.l.b16 %v489
        %v2275 = vunpack.c.l.b16 %v490
        %v2276 = vunpack.c.l.b16 %v491
        %v2277 = vunpack.c.l.b16 %v492
        %v2278 = vunpack.c.l.b16 %v493
        %v2279 = vunpack.c.l.b16 %v494
        %v2280 = vunpack.c.l.b16 %v495
        %v2281 = vunpack.c.l.b16 %v496
        %v2282 = vunpack.c.l.b16 %v497
        %v2283 = vunpack.c.l.b16 %v498
        %v2284 = vunpack.c.l.b16 %v499
        %v2285 = vunpack.c.l.b16 %v500
        %v2286 = vunpack.c.l.b16 %v501
        %v2287 = vunpack.c.l.b16 %v502
        %v2288 = vunpack.c.l.b16 %v503
        %v2289 = vunpack.c.l.b16 %v504
        %v2290 = vunpack.c.l.b16 %v505
        %v2291 = vunpack.c.l.b16 %v506
        %v2292 = vunpack.c.l.b16 %v507
        %v2293 = vunpack.c.l.b16 %v508
        %v2294 = vunpack.c.l.b16 %v509
        %v2295 = vunpack.c.l.b16 %v510
        %v2296 = vunpack.c.l.b16 %v511
        %v2297 = vunpack.c.l.b16 %v512
        %v2298 = vunpack.c.l.b16 %v513
        %v2299 = vunpack.c.l.b16 %v514
        %v2300 = vunpack.c.l.b16 %v515
        %v2301 = vunpack.c.l.b16 %v516
        %v2302 = vunpack.c.l.b16 %v517
        %v2303 = vpack.c.b16 %v2240, %v2239
        %v2304 = vpack.c.b16 %v2242, %v2241
        %v2305 = vpack.c.b16 %v2244, %v2243
        %v2306 = vpack.c.b16 %v2246, %v2245
        %v2307 = vpack.c.b16 %v2248, %v2247
        %v2308 = vpack.c.b16 %v2250, %v2249
        %v2309 = vpack.c.b16 %v2252, %v2251
        %v2310 = vpack.c.b16 %v2254, %v2253
        %v2311 = vpack.c.b16 %v2256, %v2255
        %v2312 = vpack.c.b16 %v2258, %v2257
        %v2313 = vpack.c.b16 %v2260, %v2259
        %v2314 = vpack.c.b16 %v2262, %v2261
        %v2315 = vpack.c.b16 %v2264, %v2263
        %v2316 = vpack.c.b16 %v2266, %v2265
        %v2317 = vpack.c.b16 %v2268, %v2267
        %v2318 = vpack.c.b16 %v2270, %v2269
        %v2319 = vpack.c.b16 %v2272, %v2271
        %v2320 = vpack.c.b16 %v2274, %v2273
        %v2321 = vpack.c.b16 %v2276, %v2275
        %v2322 = vpack.c.b16 %v2278, %v2277
        %v2323 = vpack.c.b16 %v2280, %v2279
        %v2324 = vpack.c.b16 %v2282, %v2281
        %v2325 = vpack.c.b16 %v2284, %v2283
        %v2326 = vpack.c.b16 %v2286, %v2285
        %v2327 = vpack.c.b16 %v2288, %v2287
        %v2328 = vpack.c.b16 %v2290, %v2289
        %v2329 = vpack.c.b16 %v2292, %v2291
        %v2330 = vpack.c.b16 %v2294, %v2293
        %v2331 = vpack.c.b16 %v2296, %v2295
        %v2332 = vpack.c.b16 %v2298, %v2297
        %v2333 = vpack.c.b16 %v2300, %v2299
        %v2334 = vpack.c.b16 %v2302, %v2301
        %2367 = vmatprep.subr.bf16.mxu0 0
        %2368 = vmatpush1.bf16.msra.mxu0 %v2303
        %2369 = vmatprep.subr.bf16.mxu0 0
        %2370 = vmatpush1.bf16.msra.mxu0 %v2304
        %2371 = vmatprep.subr.bf16.mxu0 0
        %2372 = vmatpush1.bf16.msra.mxu0 %v2305
        %2373 = vmatprep.subr.bf16.mxu0 0
        %2374 = vmatpush1.bf16.msra.mxu0 %v2306
        %2375 = vmatprep.subr.bf16.mxu0 0
        %2376 = vmatpush1.bf16.msra.mxu0 %v2307
        %2377 = vmatprep.subr.bf16.mxu0 0
        %2378 = vmatpush1.bf16.msra.mxu0 %v2308
        %2379 = vmatprep.subr.bf16.mxu0 0
        %2380 = vmatpush1.bf16.msra.mxu0 %v2309
        %2381 = vmatprep.subr.bf16.mxu0 0
        %2382 = vmatpush1.bf16.msra.mxu0 %v2310
        %2383 = vmatprep.subr.bf16.mxu0 0
        %2384 = vmatpush1.bf16.msra.mxu0 %v2311
        %2385 = vmatprep.subr.bf16.mxu0 0
        %2386 = vmatpush1.bf16.msra.mxu0 %v2312
        %2387 = vmatprep.subr.bf16.mxu0 0
        %2388 = vmatpush1.bf16.msra.mxu0 %v2313
        %2389 = vmatprep.subr.bf16.mxu0 0
        %2390 = vmatpush1.bf16.msra.mxu0 %v2314
        %2391 = vmatprep.subr.bf16.mxu0 0
        %2392 = vmatpush1.bf16.msra.mxu0 %v2315
        %2393 = vmatprep.subr.bf16.mxu0 0
        %2394 = vmatpush1.bf16.msra.mxu0 %v2316
        %2395 = vmatprep.subr.bf16.mxu0 0
        %2396 = vmatpush1.bf16.msra.mxu0 %v2317
        %2397 = vmatprep.subr.bf16.mxu0 0
        %2398 = vmatpush1.bf16.msra.mxu0 %v2318
        %2399 = vmatprep.mubr.bf16.mxu0 %v2168
        %2400 = vmatmul.mubr.bf16.gmra.mrb[0].mxu0 %v2167
        %v2401 = vpop.f32.mrb[0].mxu0
        %v2402 = vadd.f32 %v2174, %v2401
        %v2403 = vpop.f32.mrb[0].mxu0
        %v2404 = vpop.f32.mrb[0].mxu0
        %v2405 = vpop.f32.mrb[0].mxu0
        %2406 = vdwg.mxu0
        %2407 = vmatprep.subr.bf16.mxu0 0
        %2408 = vmatpush1.bf16.msra.mxu0 %v2319
        %2409 = vmatprep.subr.bf16.mxu0 0
        %2410 = vmatpush1.bf16.msra.mxu0 %v2320
        %2411 = vmatprep.subr.bf16.mxu0 0
        %2412 = vmatpush1.bf16.msra.mxu0 %v2321
        %2413 = vmatprep.subr.bf16.mxu0 0
        %2414 = vmatpush1.bf16.msra.mxu0 %v2322
        %2415 = vmatprep.subr.bf16.mxu0 0
        %2416 = vmatpush1.bf16.msra.mxu0 %v2323
        %2417 = vmatprep.subr.bf16.mxu0 0
        %2418 = vmatpush1.bf16.msra.mxu0 %v2324
        %2419 = vmatprep.subr.bf16.mxu0 0
        %2420 = vmatpush1.bf16.msra.mxu0 %v2325
        %2421 = vmatprep.subr.bf16.mxu0 0
        %2422 = vmatpush1.bf16.msra.mxu0 %v2326
        %2423 = vmatprep.subr.bf16.mxu0 0
        %2424 = vmatpush1.bf16.msra.mxu0 %v2327
        %2425 = vmatprep.subr.bf16.mxu0 0
        %2426 = vmatpush1.bf16.msra.mxu0 %v2328
        %2427 = vmatprep.subr.bf16.mxu0 0
        %2428 = vmatpush1.bf16.msra.mxu0 %v2329
        %2429 = vmatprep.subr.bf16.mxu0 0
        %2430 = vmatpush1.bf16.msra.mxu0 %v2330
        %2431 = vmatprep.subr.bf16.mxu0 0
        %2432 = vmatpush1.bf16.msra.mxu0 %v2331
        %2433 = vmatprep.subr.bf16.mxu0 0
        %2434 = vmatpush1.bf16.msra.mxu0 %v2332
        %2435 = vmatprep.subr.bf16.mxu0 0
        %2436 = vmatpush1.bf16.msra.mxu0 %v2333
        %2437 = vmatprep.subr.bf16.mxu0 0
        %2438 = vmatpush1.bf16.msra.mxu0 %v2334
        %2439 = vmatprep.mubr.bf16.mxu0 %v2170
        %2440 = vmatmul.mubr.bf16.gmra.mrb[0].mxu0 %v2169
        %v2441 = vpop.f32.mrb[0].mxu0
        %v2442 = vadd.f32 %v2402, %v2441
        %v2443 = vpop.f32.mrb[0].mxu0
        %v2444 = vpop.f32.mrb[0].mxu0
        %v2445 = vpop.f32.mrb[0].mxu0
        %2446 = vdwg.mxu0
        %v2447 = vadd.f32 %v1871, %v2442
        %2448 = vadd.xlane.f32.xlu0 %v2447
        %v2449 = vpop.xlane.xlu0 %2448
        %v2450 = vmul.f32 %v2449, %v1852
        %v2451 = vsub.f32 %v2447, %v2450
        %v2452 = vmul.f32 %v2451, %v2451
        %2453 = vadd.xlane.f32.xlu0 %v2452
        %v2454 = vpop.xlane.xlu0 %2453
        %v2455 = vmul.f32 %v2454, %v1852
        %v2456 = vadd.f32 %v2455, 1e-12
        %v2457 = vrsqrt.pop %v2456
        %v2458 = vmul.f32 %v2451, %v2457
        %v2459 = vlaneseq
        %v2460 = vshrl.u32 %v2459, 7
        %v2461 = vsub.s32 6, %v2460
        %v2462 = vrot.slane %v518, %v2461
        %v2463 = vmul.f32 %v2458, %v2462
        %v2464 = vlaneseq
        %v2465 = vshrl.u32 %v2464, 7
        %v2466 = vsub.s32 7, %v2465
        %v2467 = vrot.slane %v518, %v2466
        %v2468 = vadd.f32 %v2463, %v2467
        %2469 = vst [vmem:[%s377] sm:$0xff] %v2468
        %s2470 = sand.u32 %s178, 1
        %s2471 = scalar_lea.sflag [#allocation4], %s2470
        %s2472 = sand.u32 %s178, 1
        %s2473 = smul.addr %s2472, 8
        %s2474 = scalar_lea.vmem [#allocation10], %s2473
        // Predicated region
        $region61: #{tpu_custom_call.1} parent=39 // pred_check
          %p2475 = pneg %p188
        $region62: #{tpu_custom_call.1} parent=39 // pred_check_branch
          %2477 = sbr.rel (%p2475) target = $region64
        $region63: #{tpu_custom_call.1} parent=39 // pred_region
          %s2479 = ssub.s32 128, 128
          %2480 = vsyncadd %s2471, %s2479
          %s2481 = smul.addr %s32, 128
          %s2482 = scalar_lea.hbm %s5, %s2481
          %s2484 = sshll.u32 %s2474, 4
          %s2485 = int_to_ptr.vmem [resolvable:$true] %s2484
          %2487 = dma.vmem_to_hbm [thread:$0]  %s2485, 128, %s2482, %s2471
        $region64: #{tpu_custom_call.1} parent=39 // pred_fallthru
          _
      $region40: #{tpu_custom_call.1} parent=5 // pred_fallthru
        _
      %p2488 = scmp.le.s32.totalorder 2, %s23
      // Predicated region
      $region65: #{tpu_custom_call.1} parent=5 // pred_check
        %p2489 = pneg %p2488
      $region66: #{tpu_custom_call.1} parent=5 // pred_check_branch
        %2491 = sbr.rel (%p2489) target = $region68
      $region67: #{tpu_custom_call.1} parent=5 // pred_region
        %s2492 = ssub.s32 %s23, 2
        // Predicated region
        $region69: #{tpu_custom_call.1} parent=67 // pred_check
          %p2493 = pneg %p194
        $region70: #{tpu_custom_call.1} parent=67 // pred_check_branch
          %2495 = sbr.rel (%p2493) target = $region72
        $region71: #{tpu_custom_call.1} parent=67 // pred_region
          %s2496 = sand.u32 %s179, 1
          %s2497 = scalar_lea.sflag [#allocation4], %s2496
          %s2498 = sand.u32 %s179, 1
          %s2499 = smul.addr %s2498, 8
          %s2500 = scalar_lea.vmem [#allocation10], %s2499
          %2501 = dma.done %s2497, 128
        $region72: #{tpu_custom_call.1} parent=67 // pred_fallthru
          _
      $region68: #{tpu_custom_call.1} parent=5 // pred_fallthru
        _
    $region6: #{tpu_custom_call.1} parent=1 // loop_footer
      %s27 = sadd.s32 1, %s23
    $region7: #{tpu_custom_call.1} parent=1 // loop_footer_branch
      %22 = sbr.rel target = $region3
    $region8: #{tpu_custom_call.1} parent=1 // loop_exit
      _
    %2502 = vsyncpa [#allocation3], 1
    %s2503 = scalar_lea.sflag [#allocation3], 1
    %2504 = vsyncpa %s2503, 1
    %2505 = vsyncpa [#allocation6], 1
    %s2506 = scalar_lea.sflag [#allocation6], 1
    %2507 = vsyncpa %s2506, 1
    %2508 = vsyncpa [#allocation9], 1
    %s2509 = scalar_lea.sflag [#allocation9], 1
    %2510 = vsyncpa %s2509, 1
    %2511 = vsyncpa [#allocation4], 1
    %s2512 = scalar_lea.sflag [#allocation4], 1
    %2513 = vsyncpa %s2512, 1

</llo_original>
